<compile_context>
chip_gen: v7x
topology: tpu7x:2x2x1
jax: 0.10.0
libtpu: 0.0.40
codegen_flags: <defaults>
</compile_context>

<pallas_src>
import functools

import jax
import jax.numpy as jnp
from jax.experimental import pallas as pl
from jax.experimental.pallas import tpu as pltpu


def _distance_head_kernel(x_ref, w_ref, b_ref, o_ref, *, C, H, W):
    """One grid step == one batch element.

    x_ref : (1, C, H+2, W+2) VMEM  zero-padded NCHW input tile (W on lanes)
    w_ref : (C*9,)           SMEM  conv weights, flattened index c*9 + ky*3 + kx
    b_ref : (1,)             SMEM  conv bias
    o_ref : (1, H, W)        VMEM  sigmoid(conv) output plane
    """
    # Bias folded into the accumulator init.
    acc = jnp.full((H, W), b_ref[0], dtype=jnp.float32)

    # 3x3 conv as 9 shifted taps.  For each tap, read the (C, H, W) window once
    # and accumulate channel planes with scalar-times-vector VPU FMAs.
    for ky in range(3):
        for kx in range(3):
            patch = x_ref[0, :, ky:ky + H, kx:kx + W].astype(jnp.float32)
            for c in range(C):
                acc = acc + w_ref[c * 9 + ky * 3 + kx] * patch[c]

    o_ref[0] = jax.nn.sigmoid(acc)


def distance_head_forward(x_nchw, weight, bias):
    """x_nchw: (B, C, H, W); weight: (1, C, 3, 3); bias: (1,) -> (B, 1, H, W)."""
    B, C, H, W = x_nchw.shape

    # SAME-conv halo.  Input stays NCHW (no transpose), so W maps to lanes.
    x_pad = jnp.pad(x_nchw, ((0, 0), (0, 0), (1, 1), (1, 1)))

    w_flat = weight.reshape(-1).astype(jnp.float32)   # (C*9,)
    b_vec = bias.astype(jnp.float32)                  # (1,)

    kernel = functools.partial(_distance_head_kernel, C=C, H=H, W=W)

    # TODO(synk): for very large H/W (esp. on v7x's 64 MiB VMEM) add an H
    # row-tiling grid axis with a 2-row halo instead of one image per step.
    out = pl.pallas_call(
        kernel,
        out_shape=jax.ShapeDtypeStruct((B, H, W), jnp.float32),
        grid_spec=pltpu.PrefetchScalarGridSpec(
            num_scalar_prefetch=0,
            grid=(B,),
            in_specs=[
                pl.BlockSpec((1, C, H + 2, W + 2), lambda i: (i, 0, 0, 0)),
                pl.BlockSpec(memory_space=pltpu.SMEM),   # weights (scalars)
                pl.BlockSpec(memory_space=pltpu.SMEM),   # bias (scalar)
            ],
            out_specs=pl.BlockSpec((1, H, W), lambda i: (i, 0, 0)),
        ),
        compiler_params=pltpu.CompilerParams(
            dimension_semantics=("parallel",)),
    )(x_pad, w_flat, b_vec)

    # (B, H, W) -> (B, 1, H, W): metadata-only reshape.
    return out.reshape(B, 1, H, W)


def _reference(x_nchw, weight, bias):
    y = jax.lax.conv_general_dilated(
        x_nchw.astype(jnp.float32), weight.astype(jnp.float32),
        window_strides=(1, 1), padding="SAME",
        dimension_numbers=("NCHW", "OIHW", "NCHW"))
    return jax.nn.sigmoid(y + bias.reshape(1, -1, 1, 1))


if __name__ == "__main__":
    # Small shapes consistent with the module: DistanceHead(input_dim=8) on 16x16 maps.
    B, C, H, W = 2, 8, 16, 16
    key = jax.random.PRNGKey(0)
    k1, k2, k3 = jax.random.split(key, 3)

    x = jax.random.normal(k1, (B, C, H, W), dtype=jnp.float32)
    weight = 0.1 * jax.random.normal(k2, (1, C, 3, 3), dtype=jnp.float32)
    bias = 0.1 * jax.random.normal(k3, (1,), dtype=jnp.float32)

    out = distance_head_forward(x, weight, bias)
    out = jax.block_until_ready(out)

    ref = _reference(x, weight, bias)
    assert out.shape == (B, 1, H, W)
    assert jnp.allclose(out, ref, atol=1e-5, rtol=1e-5)

    print("KERNEL_OK")
</pallas_src>

<mosaic_0001>
module attributes {stable_mosaic.version = 11 : i64} {
  func.func @_distance_head_kernel(%arg0: i32, %arg1: memref<1x8x18x18xf32, #tpu.memory_space<vmem>>, %arg2: memref<72xf32, #tpu.memory_space<smem>>, %arg3: memref<1xf32, #tpu.memory_space<smem>>, %arg4: memref<1x16x16xf32, #tpu.memory_space<vmem>>) attributes {dimension_semantics = [#tpu.dimension_semantics<parallel>], iteration_bounds = array<i64: 2>, scalar_prefetch = 0 : i64, scratch_operands = 0 : i64, tpu.core_type = #tpu.core_type<tc>, window_params = [{transform_indices = @transform_0, window_bounds = array<i64: 1, 8, 18, 18>}, {transform_indices = @transform_1, window_bounds = array<i64: 72>}, {transform_indices = @transform_2, window_bounds = array<i64: 1>}, {transform_indices = @transform_3, window_bounds = array<i64: 1, 16, 16>}]} {
    %c0 = arith.constant 0 : index
    %0 = memref.load %arg3[%c0] : memref<1xf32, #tpu.memory_space<smem>>
    %1 = vector.broadcast %0 : f32 to vector<16x16xf32>
    %c0_0 = arith.constant 0 : index
    %c0_1 = arith.constant 0 : index
    %c0_2 = arith.constant 0 : index
    %c0_3 = arith.constant 0 : index
    %2 = vector.load %arg1[%c0_0, %c0_1, %c0_2, %c0_3] : memref<1x8x18x18xf32, #tpu.memory_space<vmem>>, vector<1x8x16x16xf32>
    %3 = vector.shape_cast %2 : vector<1x8x16x16xf32> to vector<8x16x16xf32>
    %c0_4 = arith.constant 0 : index
    %4 = memref.load %arg2[%c0_4] : memref<72xf32, #tpu.memory_space<smem>>
    %5 = vector.extract_strided_slice %3 {offsets = [0, 0, 0], sizes = [1, 16, 16], strides = [1, 1, 1]} : vector<8x16x16xf32> to vector<1x16x16xf32>
    %6 = vector.shape_cast %5 : vector<1x16x16xf32> to vector<16x16xf32>
    %7 = vector.broadcast %4 : f32 to vector<16x16xf32>
    %8 = arith.mulf %7, %6 : vector<16x16xf32>
    %9 = arith.addf %1, %8 : vector<16x16xf32>
    %c9 = arith.constant 9 : index
    %10 = memref.load %arg2[%c9] : memref<72xf32, #tpu.memory_space<smem>>
    %11 = vector.extract_strided_slice %3 {offsets = [1, 0, 0], sizes = [1, 16, 16], strides = [1, 1, 1]} : vector<8x16x16xf32> to vector<1x16x16xf32>
    %12 = vector.shape_cast %11 : vector<1x16x16xf32> to vector<16x16xf32>
    %13 = vector.broadcast %10 : f32 to vector<16x16xf32>
    %14 = arith.mulf %13, %12 : vector<16x16xf32>
    %15 = arith.addf %9, %14 : vector<16x16xf32>
    %c18 = arith.constant 18 : index
    %16 = memref.load %arg2[%c18] : memref<72xf32, #tpu.memory_space<smem>>
    %17 = vector.extract_strided_slice %3 {offsets = [2, 0, 0], sizes = [1, 16, 16], strides = [1, 1, 1]} : vector<8x16x16xf32> to vector<1x16x16xf32>
    %18 = vector.shape_cast %17 : vector<1x16x16xf32> to vector<16x16xf32>
    %19 = vector.broadcast %16 : f32 to vector<16x16xf32>
    %20 = arith.mulf %19, %18 : vector<16x16xf32>
    %21 = arith.addf %15, %20 : vector<16x16xf32>
    %c27 = arith.constant 27 : index
    %22 = memref.load %arg2[%c27] : memref<72xf32, #tpu.memory_space<smem>>
    %23 = vector.extract_strided_slice %3 {offsets = [3, 0, 0], sizes = [1, 16, 16], strides = [1, 1, 1]} : vector<8x16x16xf32> to vector<1x16x16xf32>
    %24 = vector.shape_cast %23 : vector<1x16x16xf32> to vector<16x16xf32>
    %25 = vector.broadcast %22 : f32 to vector<16x16xf32>
    %26 = arith.mulf %25, %24 : vector<16x16xf32>
    %27 = arith.addf %21, %26 : vector<16x16xf32>
    %c36 = arith.constant 36 : index
    %28 = memref.load %arg2[%c36] : memref<72xf32, #tpu.memory_space<smem>>
    %29 = vector.extract_strided_slice %3 {offsets = [4, 0, 0], sizes = [1, 16, 16], strides = [1, 1, 1]} : vector<8x16x16xf32> to vector<1x16x16xf32>
    %30 = vector.shape_cast %29 : vector<1x16x16xf32> to vector<16x16xf32>
    %31 = vector.broadcast %28 : f32 to vector<16x16xf32>
    %32 = arith.mulf %31, %30 : vector<16x16xf32>
    %33 = arith.addf %27, %32 : vector<16x16xf32>
    %c45 = arith.constant 45 : index
    %34 = memref.load %arg2[%c45] : memref<72xf32, #tpu.memory_space<smem>>
    %35 = vector.extract_strided_slice %3 {offsets = [5, 0, 0], sizes = [1, 16, 16], strides = [1, 1, 1]} : vector<8x16x16xf32> to vector<1x16x16xf32>
    %36 = vector.shape_cast %35 : vector<1x16x16xf32> to vector<16x16xf32>
    %37 = vector.broadcast %34 : f32 to vector<16x16xf32>
    %38 = arith.mulf %37, %36 : vector<16x16xf32>
    %39 = arith.addf %33, %38 : vector<16x16xf32>
    %c54 = arith.constant 54 : index
    %40 = memref.load %arg2[%c54] : memref<72xf32, #tpu.memory_space<smem>>
    %41 = vector.extract_strided_slice %3 {offsets = [6, 0, 0], sizes = [1, 16, 16], strides = [1, 1, 1]} : vector<8x16x16xf32> to vector<1x16x16xf32>
    %42 = vector.shape_cast %41 : vector<1x16x16xf32> to vector<16x16xf32>
    %43 = vector.broadcast %40 : f32 to vector<16x16xf32>
    %44 = arith.mulf %43, %42 : vector<16x16xf32>
    %45 = arith.addf %39, %44 : vector<16x16xf32>
    %c63 = arith.constant 63 : index
    %46 = memref.load %arg2[%c63] : memref<72xf32, #tpu.memory_space<smem>>
    %47 = vector.extract_strided_slice %3 {offsets = [7, 0, 0], sizes = [1, 16, 16], strides = [1, 1, 1]} : vector<8x16x16xf32> to vector<1x16x16xf32>
    %48 = vector.shape_cast %47 : vector<1x16x16xf32> to vector<16x16xf32>
    %49 = vector.broadcast %46 : f32 to vector<16x16xf32>
    %50 = arith.mulf %49, %48 : vector<16x16xf32>
    %51 = arith.addf %45, %50 : vector<16x16xf32>
    %c0_5 = arith.constant 0 : index
    %c0_6 = arith.constant 0 : index
    %c0_7 = arith.constant 0 : index
    %c1 = arith.constant 1 : index
    %52 = vector.load %arg1[%c0_5, %c0_6, %c0_7, %c1] : memref<1x8x18x18xf32, #tpu.memory_space<vmem>>, vector<1x8x16x16xf32>
    %53 = vector.shape_cast %52 : vector<1x8x16x16xf32> to vector<8x16x16xf32>
    %c1_8 = arith.constant 1 : index
    %54 = memref.load %arg2[%c1_8] : memref<72xf32, #tpu.memory_space<smem>>
    %55 = vector.extract_strided_slice %53 {offsets = [0, 0, 0], sizes = [1, 16, 16], strides = [1, 1, 1]} : vector<8x16x16xf32> to vector<1x16x16xf32>
    %56 = vector.shape_cast %55 : vector<1x16x16xf32> to vector<16x16xf32>
    %57 = vector.broadcast %54 : f32 to vector<16x16xf32>
    %58 = arith.mulf %57, %56 : vector<16x16xf32>
    %59 = arith.addf %51, %58 : vector<16x16xf32>
    %c10 = arith.constant 10 : index
    %60 = memref.load %arg2[%c10] : memref<72xf32, #tpu.memory_space<smem>>
    %61 = vector.extract_strided_slice %53 {offsets = [1, 0, 0], sizes = [1, 16, 16], strides = [1, 1, 1]} : vector<8x16x16xf32> to vector<1x16x16xf32>
    %62 = vector.shape_cast %61 : vector<1x16x16xf32> to vector<16x16xf32>
    %63 = vector.broadcast %60 : f32 to vector<16x16xf32>
    %64 = arith.mulf %63, %62 : vector<16x16xf32>
    %65 = arith.addf %59, %64 : vector<16x16xf32>
    %c19 = arith.constant 19 : index
    %66 = memref.load %arg2[%c19] : memref<72xf32, #tpu.memory_space<smem>>
    %67 = vector.extract_strided_slice %53 {offsets = [2, 0, 0], sizes = [1, 16, 16], strides = [1, 1, 1]} : vector<8x16x16xf32> to vector<1x16x16xf32>
    %68 = vector.shape_cast %67 : vector<1x16x16xf32> to vector<16x16xf32>
    %69 = vector.broadcast %66 : f32 to vector<16x16xf32>
    %70 = arith.mulf %69, %68 : vector<16x16xf32>
    %71 = arith.addf %65, %70 : vector<16x16xf32>
    %c28 = arith.constant 28 : index
    %72 = memref.load %arg2[%c28] : memref<72xf32, #tpu.memory_space<smem>>
    %73 = vector.extract_strided_slice %53 {offsets = [3, 0, 0], sizes = [1, 16, 16], strides = [1, 1, 1]} : vector<8x16x16xf32> to vector<1x16x16xf32>
    %74 = vector.shape_cast %73 : vector<1x16x16xf32> to vector<16x16xf32>
    %75 = vector.broadcast %72 : f32 to vector<16x16xf32>
    %76 = arith.mulf %75, %74 : vector<16x16xf32>
    %77 = arith.addf %71, %76 : vector<16x16xf32>
    %c37 = arith.constant 37 : index
    %78 = memref.load %arg2[%c37] : memref<72xf32, #tpu.memory_space<smem>>
    %79 = vector.extract_strided_slice %53 {offsets = [4, 0, 0], sizes = [1, 16, 16], strides = [1, 1, 1]} : vector<8x16x16xf32> to vector<1x16x16xf32>
    %80 = vector.shape_cast %79 : vector<1x16x16xf32> to vector<16x16xf32>
    %81 = vector.broadcast %78 : f32 to vector<16x16xf32>
    %82 = arith.mulf %81, %80 : vector<16x16xf32>
    %83 = arith.addf %77, %82 : vector<16x16xf32>
    %c46 = arith.constant 46 : index
    %84 = memref.load %arg2[%c46] : memref<72xf32, #tpu.memory_space<smem>>
    %85 = vector.extract_strided_slice %53 {offsets = [5, 0, 0], sizes = [1, 16, 16], strides = [1, 1, 1]} : vector<8x16x16xf32> to vector<1x16x16xf32>
    %86 = vector.shape_cast %85 : vector<1x16x16xf32> to vector<16x16xf32>
    %87 = vector.broadcast %84 : f32 to vector<16x16xf32>
    %88 = arith.mulf %87, %86 : vector<16x16xf32>
    %89 = arith.addf %83, %88 : vector<16x16xf32>
    %c55 = arith.constant 55 : index
    %90 = memref.load %arg2[%c55] : memref<72xf32, #tpu.memory_space<smem>>
    %91 = vector.extract_strided_slice %53 {offsets = [6, 0, 0], sizes = [1, 16, 16], strides = [1, 1, 1]} : vector<8x16x16xf32> to vector<1x16x16xf32>
    %92 = vector.shape_cast %91 : vector<1x16x16xf32> to vector<16x16xf32>
    %93 = vector.broadcast %90 : f32 to vector<16x16xf32>
    %94 = arith.mulf %93, %92 : vector<16x16xf32>
    %95 = arith.addf %89, %94 : vector<16x16xf32>
    %c64 = arith.constant 64 : index
    %96 = memref.load %arg2[%c64] : memref<72xf32, #tpu.memory_space<smem>>
    %97 = vector.extract_strided_slice %53 {offsets = [7, 0, 0], sizes = [1, 16, 16], strides = [1, 1, 1]} : vector<8x16x16xf32> to vector<1x16x16xf32>
    %98 = vector.shape_cast %97 : vector<1x16x16xf32> to vector<16x16xf32>
    %99 = vector.broadcast %96 : f32 to vector<16x16xf32>
    %100 = arith.mulf %99, %98 : vector<16x16xf32>
    %101 = arith.addf %95, %100 : vector<16x16xf32>
    %c0_9 = arith.constant 0 : index
    %c0_10 = arith.constant 0 : index
    %c0_11 = arith.constant 0 : index
    %c2 = arith.constant 2 : index
    %102 = vector.load %arg1[%c0_9, %c0_10, %c0_11, %c2] : memref<1x8x18x18xf32, #tpu.memory_space<vmem>>, vector<1x8x16x16xf32>
    %103 = vector.shape_cast %102 : vector<1x8x16x16xf32> to vector<8x16x16xf32>
    %c2_12 = arith.constant 2 : index
    %104 = memref.load %arg2[%c2_12] : memref<72xf32, #tpu.memory_space<smem>>
    %105 = vector.extract_strided_slice %103 {offsets = [0, 0, 0], sizes = [1, 16, 16], strides = [1, 1, 1]} : vector<8x16x16xf32> to vector<1x16x16xf32>
    %106 = vector.shape_cast %105 : vector<1x16x16xf32> to vector<16x16xf32>
    %107 = vector.broadcast %104 : f32 to vector<16x16xf32>
    %108 = arith.mulf %107, %106 : vector<16x16xf32>
    %109 = arith.addf %101, %108 : vector<16x16xf32>
    %c11 = arith.constant 11 : index
    %110 = memref.load %arg2[%c11] : memref<72xf32, #tpu.memory_space<smem>>
    %111 = vector.extract_strided_slice %103 {offsets = [1, 0, 0], sizes = [1, 16, 16], strides = [1, 1, 1]} : vector<8x16x16xf32> to vector<1x16x16xf32>
    %112 = vector.shape_cast %111 : vector<1x16x16xf32> to vector<16x16xf32>
    %113 = vector.broadcast %110 : f32 to vector<16x16xf32>
    %114 = arith.mulf %113, %112 : vector<16x16xf32>
    %115 = arith.addf %109, %114 : vector<16x16xf32>
    %c20 = arith.constant 20 : index
    %116 = memref.load %arg2[%c20] : memref<72xf32, #tpu.memory_space<smem>>
    %117 = vector.extract_strided_slice %103 {offsets = [2, 0, 0], sizes = [1, 16, 16], strides = [1, 1, 1]} : vector<8x16x16xf32> to vector<1x16x16xf32>
    %118 = vector.shape_cast %117 : vector<1x16x16xf32> to vector<16x16xf32>
    %119 = vector.broadcast %116 : f32 to vector<16x16xf32>
    %120 = arith.mulf %119, %118 : vector<16x16xf32>
    %121 = arith.addf %115, %120 : vector<16x16xf32>
    %c29 = arith.constant 29 : index
    %122 = memref.load %arg2[%c29] : memref<72xf32, #tpu.memory_space<smem>>
    %123 = vector.extract_strided_slice %103 {offsets = [3, 0, 0], sizes = [1, 16, 16], strides = [1, 1, 1]} : vector<8x16x16xf32> to vector<1x16x16xf32>
    %124 = vector.shape_cast %123 : vector<1x16x16xf32> to vector<16x16xf32>
    %125 = vector.broadcast %122 : f32 to vector<16x16xf32>
    %126 = arith.mulf %125, %124 : vector<16x16xf32>
    %127 = arith.addf %121, %126 : vector<16x16xf32>
    %c38 = arith.constant 38 : index
    %128 = memref.load %arg2[%c38] : memref<72xf32, #tpu.memory_space<smem>>
    %129 = vector.extract_strided_slice %103 {offsets = [4, 0, 0], sizes = [1, 16, 16], strides = [1, 1, 1]} : vector<8x16x16xf32> to vector<1x16x16xf32>
    %130 = vector.shape_cast %129 : vector<1x16x16xf32> to vector<16x16xf32>
    %131 = vector.broadcast %128 : f32 to vector<16x16xf32>
    %132 = arith.mulf %131, %130 : vector<16x16xf32>
    %133 = arith.addf %127, %132 : vector<16x16xf32>
    %c47 = arith.constant 47 : index
    %134 = memref.load %arg2[%c47] : memref<72xf32, #tpu.memory_space<smem>>
    %135 = vector.extract_strided_slice %103 {offsets = [5, 0, 0], sizes = [1, 16, 16], strides = [1, 1, 1]} : vector<8x16x16xf32> to vector<1x16x16xf32>
    %136 = vector.shape_cast %135 : vector<1x16x16xf32> to vector<16x16xf32>
    %137 = vector.broadcast %134 : f32 to vector<16x16xf32>
    %138 = arith.mulf %137, %136 : vector<16x16xf32>
    %139 = arith.addf %133, %138 : vector<16x16xf32>
    %c56 = arith.constant 56 : index
    %140 = memref.load %arg2[%c56] : memref<72xf32, #tpu.memory_space<smem>>
    %141 = vector.extract_strided_slice %103 {offsets = [6, 0, 0], sizes = [1, 16, 16], strides = [1, 1, 1]} : vector<8x16x16xf32> to vector<1x16x16xf32>
    %142 = vector.shape_cast %141 : vector<1x16x16xf32> to vector<16x16xf32>
    %143 = vector.broadcast %140 : f32 to vector<16x16xf32>
    %144 = arith.mulf %143, %142 : vector<16x16xf32>
    %145 = arith.addf %139, %144 : vector<16x16xf32>
    %c65 = arith.constant 65 : index
    %146 = memref.load %arg2[%c65] : memref<72xf32, #tpu.memory_space<smem>>
    %147 = vector.extract_strided_slice %103 {offsets = [7, 0, 0], sizes = [1, 16, 16], strides = [1, 1, 1]} : vector<8x16x16xf32> to vector<1x16x16xf32>
    %148 = vector.shape_cast %147 : vector<1x16x16xf32> to vector<16x16xf32>
    %149 = vector.broadcast %146 : f32 to vector<16x16xf32>
    %150 = arith.mulf %149, %148 : vector<16x16xf32>
    %151 = arith.addf %145, %150 : vector<16x16xf32>
    %c0_13 = arith.constant 0 : index
    %c0_14 = arith.constant 0 : index
    %c1_15 = arith.constant 1 : index
    %c0_16 = arith.constant 0 : index
    %152 = vector.load %arg1[%c0_13, %c0_14, %c1_15, %c0_16] : memref<1x8x18x18xf32, #tpu.memory_space<vmem>>, vector<1x8x16x16xf32>
    %153 = vector.shape_cast %152 : vector<1x8x16x16xf32> to vector<8x16x16xf32>
    %c3 = arith.constant 3 : index
    %154 = memref.load %arg2[%c3] : memref<72xf32, #tpu.memory_space<smem>>
    %155 = vector.extract_strided_slice %153 {offsets = [0, 0, 0], sizes = [1, 16, 16], strides = [1, 1, 1]} : vector<8x16x16xf32> to vector<1x16x16xf32>
    %156 = vector.shape_cast %155 : vector<1x16x16xf32> to vector<16x16xf32>
    %157 = vector.broadcast %154 : f32 to vector<16x16xf32>
    %158 = arith.mulf %157, %156 : vector<16x16xf32>
    %159 = arith.addf %151, %158 : vector<16x16xf32>
    %c12 = arith.constant 12 : index
    %160 = memref.load %arg2[%c12] : memref<72xf32, #tpu.memory_space<smem>>
    %161 = vector.extract_strided_slice %153 {offsets = [1, 0, 0], sizes = [1, 16, 16], strides = [1, 1, 1]} : vector<8x16x16xf32> to vector<1x16x16xf32>
    %162 = vector.shape_cast %161 : vector<1x16x16xf32> to vector<16x16xf32>
    %163 = vector.broadcast %160 : f32 to vector<16x16xf32>
    %164 = arith.mulf %163, %162 : vector<16x16xf32>
    %165 = arith.addf %159, %164 : vector<16x16xf32>
    %c21 = arith.constant 21 : index
    %166 = memref.load %arg2[%c21] : memref<72xf32, #tpu.memory_space<smem>>
    %167 = vector.extract_strided_slice %153 {offsets = [2, 0, 0], sizes = [1, 16, 16], strides = [1, 1, 1]} : vector<8x16x16xf32> to vector<1x16x16xf32>
    %168 = vector.shape_cast %167 : vector<1x16x16xf32> to vector<16x16xf32>
    %169 = vector.broadcast %166 : f32 to vector<16x16xf32>
    %170 = arith.mulf %169, %168 : vector<16x16xf32>
    %171 = arith.addf %165, %170 : vector<16x16xf32>
    %c30 = arith.constant 30 : index
    %172 = memref.load %arg2[%c30] : memref<72xf32, #tpu.memory_space<smem>>
    %173 = vector.extract_strided_slice %153 {offsets = [3, 0, 0], sizes = [1, 16, 16], strides = [1, 1, 1]} : vector<8x16x16xf32> to vector<1x16x16xf32>
    %174 = vector.shape_cast %173 : vector<1x16x16xf32> to vector<16x16xf32>
    %175 = vector.broadcast %172 : f32 to vector<16x16xf32>
    %176 = arith.mulf %175, %174 : vector<16x16xf32>
    %177 = arith.addf %171, %176 : vector<16x16xf32>
    %c39 = arith.constant 39 : index
    %178 = memref.load %arg2[%c39] : memref<72xf32, #tpu.memory_space<smem>>
    %179 = vector.extract_strided_slice %153 {offsets = [4, 0, 0], sizes = [1, 16, 16], strides = [1, 1, 1]} : vector<8x16x16xf32> to vector<1x16x16xf32>
    %180 = vector.shape_cast %179 : vector<1x16x16xf32> to vector<16x16xf32>
    %181 = vector.broadcast %178 : f32 to vector<16x16xf32>
    %182 = arith.mulf %181, %180 : vector<16x16xf32>
    %183 = arith.addf %177, %182 : vector<16x16xf32>
    %c48 = arith.constant 48 : index
    %184 = memref.load %arg2[%c48] : memref<72xf32, #tpu.memory_space<smem>>
    %185 = vector.extract_strided_slice %153 {offsets = [5, 0, 0], sizes = [1, 16, 16], strides = [1, 1, 1]} : vector<8x16x16xf32> to vector<1x16x16xf32>
    %186 = vector.shape_cast %185 : vector<1x16x16xf32> to vector<16x16xf32>
    %187 = vector.broadcast %184 : f32 to vector<16x16xf32>
    %188 = arith.mulf %187, %186 : vector<16x16xf32>
    %189 = arith.addf %183, %188 : vector<16x16xf32>
    %c57 = arith.constant 57 : index
    %190 = memref.load %arg2[%c57] : memref<72xf32, #tpu.memory_space<smem>>
    %191 = vector.extract_strided_slice %153 {offsets = [6, 0, 0], sizes = [1, 16, 16], strides = [1, 1, 1]} : vector<8x16x16xf32> to vector<1x16x16xf32>
    %192 = vector.shape_cast %191 : vector<1x16x16xf32> to vector<16x16xf32>
    %193 = vector.broadcast %190 : f32 to vector<16x16xf32>
    %194 = arith.mulf %193, %192 : vector<16x16xf32>
    %195 = arith.addf %189, %194 : vector<16x16xf32>
    %c66 = arith.constant 66 : index
    %196 = memref.load %arg2[%c66] : memref<72xf32, #tpu.memory_space<smem>>
    %197 = vector.extract_strided_slice %153 {offsets = [7, 0, 0], sizes = [1, 16, 16], strides = [1, 1, 1]} : vector<8x16x16xf32> to vector<1x16x16xf32>
    %198 = vector.shape_cast %197 : vector<1x16x16xf32> to vector<16x16xf32>
    %199 = vector.broadcast %196 : f32 to vector<16x16xf32>
    %200 = arith.mulf %199, %198 : vector<16x16xf32>
    %201 = arith.addf %195, %200 : vector<16x16xf32>
    %c0_17 = arith.constant 0 : index
    %c0_18 = arith.constant 0 : index
    %c1_19 = arith.constant 1 : index
    %c1_20 = arith.constant 1 : index
    %202 = vector.load %arg1[%c0_17, %c0_18, %c1_19, %c1_20] : memref<1x8x18x18xf32, #tpu.memory_space<vmem>>, vector<1x8x16x16xf32>
    %203 = vector.shape_cast %202 : vector<1x8x16x16xf32> to vector<8x16x16xf32>
    %c4 = arith.constant 4 : index
    %204 = memref.load %arg2[%c4] : memref<72xf32, #tpu.memory_space<smem>>
    %205 = vector.extract_strided_slice %203 {offsets = [0, 0, 0], sizes = [1, 16, 16], strides = [1, 1, 1]} : vector<8x16x16xf32> to vector<1x16x16xf32>
    %206 = vector.shape_cast %205 : vector<1x16x16xf32> to vector<16x16xf32>
    %207 = vector.broadcast %204 : f32 to vector<16x16xf32>
    %208 = arith.mulf %207, %206 : vector<16x16xf32>
    %209 = arith.addf %201, %208 : vector<16x16xf32>
    %c13 = arith.constant 13 : index
    %210 = memref.load %arg2[%c13] : memref<72xf32, #tpu.memory_space<smem>>
    %211 = vector.extract_strided_slice %203 {offsets = [1, 0, 0], sizes = [1, 16, 16], strides = [1, 1, 1]} : vector<8x16x16xf32> to vector<1x16x16xf32>
    %212 = vector.shape_cast %211 : vector<1x16x16xf32> to vector<16x16xf32>
    %213 = vector.broadcast %210 : f32 to vector<16x16xf32>
    %214 = arith.mulf %213, %212 : vector<16x16xf32>
    %215 = arith.addf %209, %214 : vector<16x16xf32>
    %c22 = arith.constant 22 : index
    %216 = memref.load %arg2[%c22] : memref<72xf32, #tpu.memory_space<smem>>
    %217 = vector.extract_strided_slice %203 {offsets = [2, 0, 0], sizes = [1, 16, 16], strides = [1, 1, 1]} : vector<8x16x16xf32> to vector<1x16x16xf32>
    %218 = vector.shape_cast %217 : vector<1x16x16xf32> to vector<16x16xf32>
    %219 = vector.broadcast %216 : f32 to vector<16x16xf32>
    %220 = arith.mulf %219, %218 : vector<16x16xf32>
    %221 = arith.addf %215, %220 : vector<16x16xf32>
    %c31 = arith.constant 31 : index
    %222 = memref.load %arg2[%c31] : memref<72xf32, #tpu.memory_space<smem>>
    %223 = vector.extract_strided_slice %203 {offsets = [3, 0, 0], sizes = [1, 16, 16], strides = [1, 1, 1]} : vector<8x16x16xf32> to vector<1x16x16xf32>
    %224 = vector.shape_cast %223 : vector<1x16x16xf32> to vector<16x16xf32>
    %225 = vector.broadcast %222 : f32 to vector<16x16xf32>
    %226 = arith.mulf %225, %224 : vector<16x16xf32>
    %227 = arith.addf %221, %226 : vector<16x16xf32>
    %c40 = arith.constant 40 : index
    %228 = memref.load %arg2[%c40] : memref<72xf32, #tpu.memory_space<smem>>
    %229 = vector.extract_strided_slice %203 {offsets = [4, 0, 0], sizes = [1, 16, 16], strides = [1, 1, 1]} : vector<8x16x16xf32> to vector<1x16x16xf32>
    %230 = vector.shape_cast %229 : vector<1x16x16xf32> to vector<16x16xf32>
    %231 = vector.broadcast %228 : f32 to vector<16x16xf32>
    %232 = arith.mulf %231, %230 : vector<16x16xf32>
    %233 = arith.addf %227, %232 : vector<16x16xf32>
    %c49 = arith.constant 49 : index
    %234 = memref.load %arg2[%c49] : memref<72xf32, #tpu.memory_space<smem>>
    %235 = vector.extract_strided_slice %203 {offsets = [5, 0, 0], sizes = [1, 16, 16], strides = [1, 1, 1]} : vector<8x16x16xf32> to vector<1x16x16xf32>
    %236 = vector.shape_cast %235 : vector<1x16x16xf32> to vector<16x16xf32>
    %237 = vector.broadcast %234 : f32 to vector<16x16xf32>
    %238 = arith.mulf %237, %236 : vector<16x16xf32>
    %239 = arith.addf %233, %238 : vector<16x16xf32>
    %c58 = arith.constant 58 : index
    %240 = memref.load %arg2[%c58] : memref<72xf32, #tpu.memory_space<smem>>
    %241 = vector.extract_strided_slice %203 {offsets = [6, 0, 0], sizes = [1, 16, 16], strides = [1, 1, 1]} : vector<8x16x16xf32> to vector<1x16x16xf32>
    %242 = vector.shape_cast %241 : vector<1x16x16xf32> to vector<16x16xf32>
    %243 = vector.broadcast %240 : f32 to vector<16x16xf32>
    %244 = arith.mulf %243, %242 : vector<16x16xf32>
    %245 = arith.addf %239, %244 : vector<16x16xf32>
    %c67 = arith.constant 67 : index
    %246 = memref.load %arg2[%c67] : memref<72xf32, #tpu.memory_space<smem>>
    %247 = vector.extract_strided_slice %203 {offsets = [7, 0, 0], sizes = [1, 16, 16], strides = [1, 1, 1]} : vector<8x16x16xf32> to vector<1x16x16xf32>
    %248 = vector.shape_cast %247 : vector<1x16x16xf32> to vector<16x16xf32>
    %249 = vector.broadcast %246 : f32 to vector<16x16xf32>
    %250 = arith.mulf %249, %248 : vector<16x16xf32>
    %251 = arith.addf %245, %250 : vector<16x16xf32>
    %c0_21 = arith.constant 0 : index
    %c0_22 = arith.constant 0 : index
    %c1_23 = arith.constant 1 : index
    %c2_24 = arith.constant 2 : index
    %252 = vector.load %arg1[%c0_21, %c0_22, %c1_23, %c2_24] : memref<1x8x18x18xf32, #tpu.memory_space<vmem>>, vector<1x8x16x16xf32>
    %253 = vector.shape_cast %252 : vector<1x8x16x16xf32> to vector<8x16x16xf32>
    %c5 = arith.constant 5 : index
    %254 = memref.load %arg2[%c5] : memref<72xf32, #tpu.memory_space<smem>>
    %255 = vector.extract_strided_slice %253 {offsets = [0, 0, 0], sizes = [1, 16, 16], strides = [1, 1, 1]} : vector<8x16x16xf32> to vector<1x16x16xf32>
    %256 = vector.shape_cast %255 : vector<1x16x16xf32> to vector<16x16xf32>
    %257 = vector.broadcast %254 : f32 to vector<16x16xf32>
    %258 = arith.mulf %257, %256 : vector<16x16xf32>
    %259 = arith.addf %251, %258 : vector<16x16xf32>
    %c14 = arith.constant 14 : index
    %260 = memref.load %arg2[%c14] : memref<72xf32, #tpu.memory_space<smem>>
    %261 = vector.extract_strided_slice %253 {offsets = [1, 0, 0], sizes = [1, 16, 16], strides = [1, 1, 1]} : vector<8x16x16xf32> to vector<1x16x16xf32>
    %262 = vector.shape_cast %261 : vector<1x16x16xf32> to vector<16x16xf32>
    %263 = vector.broadcast %260 : f32 to vector<16x16xf32>
    %264 = arith.mulf %263, %262 : vector<16x16xf32>
    %265 = arith.addf %259, %264 : vector<16x16xf32>
    %c23 = arith.constant 23 : index
    %266 = memref.load %arg2[%c23] : memref<72xf32, #tpu.memory_space<smem>>
    %267 = vector.extract_strided_slice %253 {offsets = [2, 0, 0], sizes = [1, 16, 16], strides = [1, 1, 1]} : vector<8x16x16xf32> to vector<1x16x16xf32>
    %268 = vector.shape_cast %267 : vector<1x16x16xf32> to vector<16x16xf32>
    %269 = vector.broadcast %266 : f32 to vector<16x16xf32>
    %270 = arith.mulf %269, %268 : vector<16x16xf32>
    %271 = arith.addf %265, %270 : vector<16x16xf32>
    %c32 = arith.constant 32 : index
    %272 = memref.load %arg2[%c32] : memref<72xf32, #tpu.memory_space<smem>>
    %273 = vector.extract_strided_slice %253 {offsets = [3, 0, 0], sizes = [1, 16, 16], strides = [1, 1, 1]} : vector<8x16x16xf32> to vector<1x16x16xf32>
    %274 = vector.shape_cast %273 : vector<1x16x16xf32> to vector<16x16xf32>
    %275 = vector.broadcast %272 : f32 to vector<16x16xf32>
    %276 = arith.mulf %275, %274 : vector<16x16xf32>
    %277 = arith.addf %271, %276 : vector<16x16xf32>
    %c41 = arith.constant 41 : index
    %278 = memref.load %arg2[%c41] : memref<72xf32, #tpu.memory_space<smem>>
    %279 = vector.extract_strided_slice %253 {offsets = [4, 0, 0], sizes = [1, 16, 16], strides = [1, 1, 1]} : vector<8x16x16xf32> to vector<1x16x16xf32>
    %280 = vector.shape_cast %279 : vector<1x16x16xf32> to vector<16x16xf32>
    %281 = vector.broadcast %278 : f32 to vector<16x16xf32>
    %282 = arith.mulf %281, %280 : vector<16x16xf32>
    %283 = arith.addf %277, %282 : vector<16x16xf32>
    %c50 = arith.constant 50 : index
    %284 = memref.load %arg2[%c50] : memref<72xf32, #tpu.memory_space<smem>>
    %285 = vector.extract_strided_slice %253 {offsets = [5, 0, 0], sizes = [1, 16, 16], strides = [1, 1, 1]} : vector<8x16x16xf32> to vector<1x16x16xf32>
    %286 = vector.shape_cast %285 : vector<1x16x16xf32> to vector<16x16xf32>
    %287 = vector.broadcast %284 : f32 to vector<16x16xf32>
    %288 = arith.mulf %287, %286 : vector<16x16xf32>
    %289 = arith.addf %283, %288 : vector<16x16xf32>
    %c59 = arith.constant 59 : index
    %290 = memref.load %arg2[%c59] : memref<72xf32, #tpu.memory_space<smem>>
    %291 = vector.extract_strided_slice %253 {offsets = [6, 0, 0], sizes = [1, 16, 16], strides = [1, 1, 1]} : vector<8x16x16xf32> to vector<1x16x16xf32>
    %292 = vector.shape_cast %291 : vector<1x16x16xf32> to vector<16x16xf32>
    %293 = vector.broadcast %290 : f32 to vector<16x16xf32>
    %294 = arith.mulf %293, %292 : vector<16x16xf32>
    %295 = arith.addf %289, %294 : vector<16x16xf32>
    %c68 = arith.constant 68 : index
    %296 = memref.load %arg2[%c68] : memref<72xf32, #tpu.memory_space<smem>>
    %297 = vector.extract_strided_slice %253 {offsets = [7, 0, 0], sizes = [1, 16, 16], strides = [1, 1, 1]} : vector<8x16x16xf32> to vector<1x16x16xf32>
    %298 = vector.shape_cast %297 : vector<1x16x16xf32> to vector<16x16xf32>
    %299 = vector.broadcast %296 : f32 to vector<16x16xf32>
    %300 = arith.mulf %299, %298 : vector<16x16xf32>
    %301 = arith.addf %295, %300 : vector<16x16xf32>
    %c0_25 = arith.constant 0 : index
    %c0_26 = arith.constant 0 : index
    %c2_27 = arith.constant 2 : index
    %c0_28 = arith.constant 0 : index
    %302 = vector.load %arg1[%c0_25, %c0_26, %c2_27, %c0_28] : memref<1x8x18x18xf32, #tpu.memory_space<vmem>>, vector<1x8x16x16xf32>
    %303 = vector.shape_cast %302 : vector<1x8x16x16xf32> to vector<8x16x16xf32>
    %c6 = arith.constant 6 : index
    %304 = memref.load %arg2[%c6] : memref<72xf32, #tpu.memory_space<smem>>
    %305 = vector.extract_strided_slice %303 {offsets = [0, 0, 0], sizes = [1, 16, 16], strides = [1, 1, 1]} : vector<8x16x16xf32> to vector<1x16x16xf32>
    %306 = vector.shape_cast %305 : vector<1x16x16xf32> to vector<16x16xf32>
    %307 = vector.broadcast %304 : f32 to vector<16x16xf32>
    %308 = arith.mulf %307, %306 : vector<16x16xf32>
    %309 = arith.addf %301, %308 : vector<16x16xf32>
    %c15 = arith.constant 15 : index
    %310 = memref.load %arg2[%c15] : memref<72xf32, #tpu.memory_space<smem>>
    %311 = vector.extract_strided_slice %303 {offsets = [1, 0, 0], sizes = [1, 16, 16], strides = [1, 1, 1]} : vector<8x16x16xf32> to vector<1x16x16xf32>
    %312 = vector.shape_cast %311 : vector<1x16x16xf32> to vector<16x16xf32>
    %313 = vector.broadcast %310 : f32 to vector<16x16xf32>
    %314 = arith.mulf %313, %312 : vector<16x16xf32>
    %315 = arith.addf %309, %314 : vector<16x16xf32>
    %c24 = arith.constant 24 : index
    %316 = memref.load %arg2[%c24] : memref<72xf32, #tpu.memory_space<smem>>
    %317 = vector.extract_strided_slice %303 {offsets = [2, 0, 0], sizes = [1, 16, 16], strides = [1, 1, 1]} : vector<8x16x16xf32> to vector<1x16x16xf32>
    %318 = vector.shape_cast %317 : vector<1x16x16xf32> to vector<16x16xf32>
    %319 = vector.broadcast %316 : f32 to vector<16x16xf32>
    %320 = arith.mulf %319, %318 : vector<16x16xf32>
    %321 = arith.addf %315, %320 : vector<16x16xf32>
    %c33 = arith.constant 33 : index
    %322 = memref.load %arg2[%c33] : memref<72xf32, #tpu.memory_space<smem>>
    %323 = vector.extract_strided_slice %303 {offsets = [3, 0, 0], sizes = [1, 16, 16], strides = [1, 1, 1]} : vector<8x16x16xf32> to vector<1x16x16xf32>
    %324 = vector.shape_cast %323 : vector<1x16x16xf32> to vector<16x16xf32>
    %325 = vector.broadcast %322 : f32 to vector<16x16xf32>
    %326 = arith.mulf %325, %324 : vector<16x16xf32>
    %327 = arith.addf %321, %326 : vector<16x16xf32>
    %c42 = arith.constant 42 : index
    %328 = memref.load %arg2[%c42] : memref<72xf32, #tpu.memory_space<smem>>
    %329 = vector.extract_strided_slice %303 {offsets = [4, 0, 0], sizes = [1, 16, 16], strides = [1, 1, 1]} : vector<8x16x16xf32> to vector<1x16x16xf32>
    %330 = vector.shape_cast %329 : vector<1x16x16xf32> to vector<16x16xf32>
    %331 = vector.broadcast %328 : f32 to vector<16x16xf32>
    %332 = arith.mulf %331, %330 : vector<16x16xf32>
    %333 = arith.addf %327, %332 : vector<16x16xf32>
    %c51 = arith.constant 51 : index
    %334 = memref.load %arg2[%c51] : memref<72xf32, #tpu.memory_space<smem>>
    %335 = vector.extract_strided_slice %303 {offsets = [5, 0, 0], sizes = [1, 16, 16], strides = [1, 1, 1]} : vector<8x16x16xf32> to vector<1x16x16xf32>
    %336 = vector.shape_cast %335 : vector<1x16x16xf32> to vector<16x16xf32>
    %337 = vector.broadcast %334 : f32 to vector<16x16xf32>
    %338 = arith.mulf %337, %336 : vector<16x16xf32>
    %339 = arith.addf %333, %338 : vector<16x16xf32>
    %c60 = arith.constant 60 : index
    %340 = memref.load %arg2[%c60] : memref<72xf32, #tpu.memory_space<smem>>
    %341 = vector.extract_strided_slice %303 {offsets = [6, 0, 0], sizes = [1, 16, 16], strides = [1, 1, 1]} : vector<8x16x16xf32> to vector<1x16x16xf32>
    %342 = vector.shape_cast %341 : vector<1x16x16xf32> to vector<16x16xf32>
    %343 = vector.broadcast %340 : f32 to vector<16x16xf32>
    %344 = arith.mulf %343, %342 : vector<16x16xf32>
    %345 = arith.addf %339, %344 : vector<16x16xf32>
    %c69 = arith.constant 69 : index
    %346 = memref.load %arg2[%c69] : memref<72xf32, #tpu.memory_space<smem>>
    %347 = vector.extract_strided_slice %303 {offsets = [7, 0, 0], sizes = [1, 16, 16], strides = [1, 1, 1]} : vector<8x16x16xf32> to vector<1x16x16xf32>
    %348 = vector.shape_cast %347 : vector<1x16x16xf32> to vector<16x16xf32>
    %349 = vector.broadcast %346 : f32 to vector<16x16xf32>
    %350 = arith.mulf %349, %348 : vector<16x16xf32>
    %351 = arith.addf %345, %350 : vector<16x16xf32>
    %c0_29 = arith.constant 0 : index
    %c0_30 = arith.constant 0 : index
    %c2_31 = arith.constant 2 : index
    %c1_32 = arith.constant 1 : index
    %352 = vector.load %arg1[%c0_29, %c0_30, %c2_31, %c1_32] : memref<1x8x18x18xf32, #tpu.memory_space<vmem>>, vector<1x8x16x16xf32>
    %353 = vector.shape_cast %352 : vector<1x8x16x16xf32> to vector<8x16x16xf32>
    %c7 = arith.constant 7 : index
    %354 = memref.load %arg2[%c7] : memref<72xf32, #tpu.memory_space<smem>>
    %355 = vector.extract_strided_slice %353 {offsets = [0, 0, 0], sizes = [1, 16, 16], strides = [1, 1, 1]} : vector<8x16x16xf32> to vector<1x16x16xf32>
    %356 = vector.shape_cast %355 : vector<1x16x16xf32> to vector<16x16xf32>
    %357 = vector.broadcast %354 : f32 to vector<16x16xf32>
    %358 = arith.mulf %357, %356 : vector<16x16xf32>
    %359 = arith.addf %351, %358 : vector<16x16xf32>
    %c16 = arith.constant 16 : index
    %360 = memref.load %arg2[%c16] : memref<72xf32, #tpu.memory_space<smem>>
    %361 = vector.extract_strided_slice %353 {offsets = [1, 0, 0], sizes = [1, 16, 16], strides = [1, 1, 1]} : vector<8x16x16xf32> to vector<1x16x16xf32>
    %362 = vector.shape_cast %361 : vector<1x16x16xf32> to vector<16x16xf32>
    %363 = vector.broadcast %360 : f32 to vector<16x16xf32>
    %364 = arith.mulf %363, %362 : vector<16x16xf32>
    %365 = arith.addf %359, %364 : vector<16x16xf32>
    %c25 = arith.constant 25 : index
    %366 = memref.load %arg2[%c25] : memref<72xf32, #tpu.memory_space<smem>>
    %367 = vector.extract_strided_slice %353 {offsets = [2, 0, 0], sizes = [1, 16, 16], strides = [1, 1, 1]} : vector<8x16x16xf32> to vector<1x16x16xf32>
    %368 = vector.shape_cast %367 : vector<1x16x16xf32> to vector<16x16xf32>
    %369 = vector.broadcast %366 : f32 to vector<16x16xf32>
    %370 = arith.mulf %369, %368 : vector<16x16xf32>
    %371 = arith.addf %365, %370 : vector<16x16xf32>
    %c34 = arith.constant 34 : index
    %372 = memref.load %arg2[%c34] : memref<72xf32, #tpu.memory_space<smem>>
    %373 = vector.extract_strided_slice %353 {offsets = [3, 0, 0], sizes = [1, 16, 16], strides = [1, 1, 1]} : vector<8x16x16xf32> to vector<1x16x16xf32>
    %374 = vector.shape_cast %373 : vector<1x16x16xf32> to vector<16x16xf32>
    %375 = vector.broadcast %372 : f32 to vector<16x16xf32>
    %376 = arith.mulf %375, %374 : vector<16x16xf32>
    %377 = arith.addf %371, %376 : vector<16x16xf32>
    %c43 = arith.constant 43 : index
    %378 = memref.load %arg2[%c43] : memref<72xf32, #tpu.memory_space<smem>>
    %379 = vector.extract_strided_slice %353 {offsets = [4, 0, 0], sizes = [1, 16, 16], strides = [1, 1, 1]} : vector<8x16x16xf32> to vector<1x16x16xf32>
    %380 = vector.shape_cast %379 : vector<1x16x16xf32> to vector<16x16xf32>
    %381 = vector.broadcast %378 : f32 to vector<16x16xf32>
    %382 = arith.mulf %381, %380 : vector<16x16xf32>
    %383 = arith.addf %377, %382 : vector<16x16xf32>
    %c52 = arith.constant 52 : index
    %384 = memref.load %arg2[%c52] : memref<72xf32, #tpu.memory_space<smem>>
    %385 = vector.extract_strided_slice %353 {offsets = [5, 0, 0], sizes = [1, 16, 16], strides = [1, 1, 1]} : vector<8x16x16xf32> to vector<1x16x16xf32>
    %386 = vector.shape_cast %385 : vector<1x16x16xf32> to vector<16x16xf32>
    %387 = vector.broadcast %384 : f32 to vector<16x16xf32>
    %388 = arith.mulf %387, %386 : vector<16x16xf32>
    %389 = arith.addf %383, %388 : vector<16x16xf32>
    %c61 = arith.constant 61 : index
    %390 = memref.load %arg2[%c61] : memref<72xf32, #tpu.memory_space<smem>>
    %391 = vector.extract_strided_slice %353 {offsets = [6, 0, 0], sizes = [1, 16, 16], strides = [1, 1, 1]} : vector<8x16x16xf32> to vector<1x16x16xf32>
    %392 = vector.shape_cast %391 : vector<1x16x16xf32> to vector<16x16xf32>
    %393 = vector.broadcast %390 : f32 to vector<16x16xf32>
    %394 = arith.mulf %393, %392 : vector<16x16xf32>
    %395 = arith.addf %389, %394 : vector<16x16xf32>
    %c70 = arith.constant 70 : index
    %396 = memref.load %arg2[%c70] : memref<72xf32, #tpu.memory_space<smem>>
    %397 = vector.extract_strided_slice %353 {offsets = [7, 0, 0], sizes = [1, 16, 16], strides = [1, 1, 1]} : vector<8x16x16xf32> to vector<1x16x16xf32>
    %398 = vector.shape_cast %397 : vector<1x16x16xf32> to vector<16x16xf32>
    %399 = vector.broadcast %396 : f32 to vector<16x16xf32>
    %400 = arith.mulf %399, %398 : vector<16x16xf32>
    %401 = arith.addf %395, %400 : vector<16x16xf32>
    %c0_33 = arith.constant 0 : index
    %c0_34 = arith.constant 0 : index
    %c2_35 = arith.constant 2 : index
    %c2_36 = arith.constant 2 : index
    %402 = vector.load %arg1[%c0_33, %c0_34, %c2_35, %c2_36] : memref<1x8x18x18xf32, #tpu.memory_space<vmem>>, vector<1x8x16x16xf32>
    %403 = vector.shape_cast %402 : vector<1x8x16x16xf32> to vector<8x16x16xf32>
    %c8 = arith.constant 8 : index
    %404 = memref.load %arg2[%c8] : memref<72xf32, #tpu.memory_space<smem>>
    %405 = vector.extract_strided_slice %403 {offsets = [0, 0, 0], sizes = [1, 16, 16], strides = [1, 1, 1]} : vector<8x16x16xf32> to vector<1x16x16xf32>
    %406 = vector.shape_cast %405 : vector<1x16x16xf32> to vector<16x16xf32>
    %407 = vector.broadcast %404 : f32 to vector<16x16xf32>
    %408 = arith.mulf %407, %406 : vector<16x16xf32>
    %409 = arith.addf %401, %408 : vector<16x16xf32>
    %c17 = arith.constant 17 : index
    %410 = memref.load %arg2[%c17] : memref<72xf32, #tpu.memory_space<smem>>
    %411 = vector.extract_strided_slice %403 {offsets = [1, 0, 0], sizes = [1, 16, 16], strides = [1, 1, 1]} : vector<8x16x16xf32> to vector<1x16x16xf32>
    %412 = vector.shape_cast %411 : vector<1x16x16xf32> to vector<16x16xf32>
    %413 = vector.broadcast %410 : f32 to vector<16x16xf32>
    %414 = arith.mulf %413, %412 : vector<16x16xf32>
    %415 = arith.addf %409, %414 : vector<16x16xf32>
    %c26 = arith.constant 26 : index
    %416 = memref.load %arg2[%c26] : memref<72xf32, #tpu.memory_space<smem>>
    %417 = vector.extract_strided_slice %403 {offsets = [2, 0, 0], sizes = [1, 16, 16], strides = [1, 1, 1]} : vector<8x16x16xf32> to vector<1x16x16xf32>
    %418 = vector.shape_cast %417 : vector<1x16x16xf32> to vector<16x16xf32>
    %419 = vector.broadcast %416 : f32 to vector<16x16xf32>
    %420 = arith.mulf %419, %418 : vector<16x16xf32>
    %421 = arith.addf %415, %420 : vector<16x16xf32>
    %c35 = arith.constant 35 : index
    %422 = memref.load %arg2[%c35] : memref<72xf32, #tpu.memory_space<smem>>
    %423 = vector.extract_strided_slice %403 {offsets = [3, 0, 0], sizes = [1, 16, 16], strides = [1, 1, 1]} : vector<8x16x16xf32> to vector<1x16x16xf32>
    %424 = vector.shape_cast %423 : vector<1x16x16xf32> to vector<16x16xf32>
    %425 = vector.broadcast %422 : f32 to vector<16x16xf32>
    %426 = arith.mulf %425, %424 : vector<16x16xf32>
    %427 = arith.addf %421, %426 : vector<16x16xf32>
    %c44 = arith.constant 44 : index
    %428 = memref.load %arg2[%c44] : memref<72xf32, #tpu.memory_space<smem>>
    %429 = vector.extract_strided_slice %403 {offsets = [4, 0, 0], sizes = [1, 16, 16], strides = [1, 1, 1]} : vector<8x16x16xf32> to vector<1x16x16xf32>
    %430 = vector.shape_cast %429 : vector<1x16x16xf32> to vector<16x16xf32>
    %431 = vector.broadcast %428 : f32 to vector<16x16xf32>
    %432 = arith.mulf %431, %430 : vector<16x16xf32>
    %433 = arith.addf %427, %432 : vector<16x16xf32>
    %c53 = arith.constant 53 : index
    %434 = memref.load %arg2[%c53] : memref<72xf32, #tpu.memory_space<smem>>
    %435 = vector.extract_strided_slice %403 {offsets = [5, 0, 0], sizes = [1, 16, 16], strides = [1, 1, 1]} : vector<8x16x16xf32> to vector<1x16x16xf32>
    %436 = vector.shape_cast %435 : vector<1x16x16xf32> to vector<16x16xf32>
    %437 = vector.broadcast %434 : f32 to vector<16x16xf32>
    %438 = arith.mulf %437, %436 : vector<16x16xf32>
    %439 = arith.addf %433, %438 : vector<16x16xf32>
    %c62 = arith.constant 62 : index
    %440 = memref.load %arg2[%c62] : memref<72xf32, #tpu.memory_space<smem>>
    %441 = vector.extract_strided_slice %403 {offsets = [6, 0, 0], sizes = [1, 16, 16], strides = [1, 1, 1]} : vector<8x16x16xf32> to vector<1x16x16xf32>
    %442 = vector.shape_cast %441 : vector<1x16x16xf32> to vector<16x16xf32>
    %443 = vector.broadcast %440 : f32 to vector<16x16xf32>
    %444 = arith.mulf %443, %442 : vector<16x16xf32>
    %445 = arith.addf %439, %444 : vector<16x16xf32>
    %c71 = arith.constant 71 : index
    %446 = memref.load %arg2[%c71] : memref<72xf32, #tpu.memory_space<smem>>
    %447 = vector.extract_strided_slice %403 {offsets = [7, 0, 0], sizes = [1, 16, 16], strides = [1, 1, 1]} : vector<8x16x16xf32> to vector<1x16x16xf32>
    %448 = vector.shape_cast %447 : vector<1x16x16xf32> to vector<16x16xf32>
    %449 = vector.broadcast %446 : f32 to vector<16x16xf32>
    %450 = arith.mulf %449, %448 : vector<16x16xf32>
    %451 = arith.addf %445, %450 : vector<16x16xf32>
    %452 = arith.negf %451 : vector<16x16xf32>
    %453 = math.exp %452 : vector<16x16xf32>
    %cst = arith.constant 1.000000e+00 : f32
    %454 = vector.broadcast %cst : f32 to vector<16x16xf32>
    %455 = arith.addf %454, %453 : vector<16x16xf32>
    %456 = arith.divf %454, %455 : vector<16x16xf32>
    %c0_37 = arith.constant 0 : index
    %c0_38 = arith.constant 0 : index
    %c0_39 = arith.constant 0 : index
    %457 = vector.load %arg4[%c0_37, %c0_38, %c0_39] : memref<1x16x16xf32, #tpu.memory_space<vmem>>, vector<1x16x16xf32>
    %458 = vector.shape_cast %457 : vector<1x16x16xf32> to vector<16x16xf32>
    %459 = vector.shape_cast %456 : vector<16x16xf32> to vector<1x16x16xf32>
    tpu.vector_store %arg4[%c0_37, %c0_38, %c0_39], %459 {strides = array<i32>} : memref<1x16x16xf32, #tpu.memory_space<vmem>>, vector<1x16x16xf32>,
    return
  }
  func.func @transform_0(%arg0: i32) -> (i32, i32, i32, i32) {
    %c0_i32 = arith.constant 0 : i32
    %c0_i32_0 = arith.constant 0 : i32
    %c0_i32_1 = arith.constant 0 : i32
    %c0_i32_2 = arith.constant 0 : i32
    return %arg0, %c0_i32, %c0_i32_0, %c0_i32_1 : i32, i32, i32, i32
  }
  func.func @transform_1(%arg0: i32) -> i32 {
    %c0_i32 = arith.constant 0 : i32
    %c0_i32_0 = arith.constant 0 : i32
    return %c0_i32 : i32
  }
  func.func @transform_2(%arg0: i32) -> i32 {
    %c0_i32 = arith.constant 0 : i32
    %c0_i32_0 = arith.constant 0 : i32
    return %c0_i32 : i32
  }
  func.func @transform_3(%arg0: i32) -> (i32, i32, i32) {
    %c0_i32 = arith.constant 0 : i32
    %c0_i32_0 = arith.constant 0 : i32
    %c0_i32_1 = arith.constant 0 : i32
    return %arg0, %c0_i32, %c0_i32_0 : i32, i32, i32
  }
}

</mosaic_0001>

<llo_original>
// kernel: tpu_custom_call.1
$region0: #{tpu_custom_call.1}
  #allocation0 [shape = 'u32[]', space=smem, size = 0x4, offset = 0x4, fixed_abs, tag = 'smem constant byte address 0x4 - core index']
  #allocation1 [shape = 'u32[144,128]{1,0:T(1,128)}', space=vmem, size = 0x12000, scoped, tag = 'internal scratch']
  #allocation2 [shape = 'f32[1]{0:T(128)S(6)}', space=smem, size = 0x200, scoped, tag = 'scoped memory for tpu_custom_call.1']
  %s0 = inlined_call_operand.vmem [shape: f32[2,8,18,18], index: 0, kind: input, shape index: {}]
  %s1 = inlined_call_operand.vmem [shape: f32[72], index: 1, kind: input, shape index: {}]
  %s2 = inlined_call_operand.<no memory space> [shape: f32[1], index: 2, kind: input, shape index: {}]
  %s3 = inlined_call_operand.hbm [shape: f32[2,16,16], index: 3, kind: output, shape index: {}]
  %s4 = sld [smem:[#allocation0]]
  $region49: #{tpu_custom_call.1} parent=0
    _
  %s6 = ssub.s32 1, %s4
  %s7 = scalar_select 0, %s6, %s4
  %8 = sst [smem:[#allocation2]] %s2
  $region1: #{tpu_custom_call.1} parent=0
    #allocation3 [shape = 'u8[512]{0}', space=smem, size = 0x200, scoped, tag = 'input window, operand 1, single buffered']
    #allocation4 [shape = 's32[2]{0}', space=sflag, size = 0x8, scoped, tag = 'scoped memory for tpu_custom_call.1']
    #allocation5 [shape = 's32[2]{0}', space=sflag, size = 0x8, scoped, tag = 'scoped memory for tpu_custom_call.1']
    #allocation6 [shape = 'u8[16384]{0}', space=vmem, size = 0x4000, scoped, tag = 'output window, operand 0']
    %9 = vsyncpa [#allocation5], 0
    %10 = vsyncpa [#allocation4], 0
    %s11 = scalar_lea.sflag [#allocation4], 1
    %12 = vsyncpa %s11, 0
    loop: start=0, step=1, limit=4
    $region2: #{tpu_custom_call.1} parent=1 // loop_pre_header
      _
    $region3: #{tpu_custom_call.1} parent=1 // loop_header
      %s14 = sphi 0, %s18
      %p15 = scmp.ge.s32.totalorder %s14, 4
      %s24 = sphi 0, %s26
      %s27 = sphi 0, %s24
      %s28 = sphi 0, %s27
      %s44 = sphi 0, %s28
      %s48 = sphi 0, %s48
      %s50 = sphi 0, %s48
      %s51 = sphi 0, %s50
      %s65 = sphi 0, %s51
      %s69 = sphi 0, %s69
      %s71 = sphi 0, %s69
      %s72 = sphi 0, %s71
      %s86 = sphi 0, %s72
      %s92 = sphi 0, %s94
      %s95 = sphi 0, %s92
      %s96 = sphi 0, %s95
      %s112 = sphi 0, %s96
    $region4: #{tpu_custom_call.1} parent=1 // loop_header_branch
      %17 = sbr.rel (%p15) target = $region8
    $region5: #{tpu_custom_call.1} parent=1 // loop_body
      %s19 = ssub.s32 %s14, 1
      %s20 = ssub.s32 %s14, 2
      %s21 = sadd.s32 %s14, 1
      %s22 = ssub.s32 %s14, %s21
      %p23 = scmp.eq.s32.totalorder %s22, 0
      %s25 = sadd.s32 %s24, 1
      %s26 = scalar_select %p23, %s24, %s25
      %p29 = pneg %p23
      %p30 = scmp.eq.s32.totalorder %s14, 1
      %p31 = por %p29, %p30
      %p32 = scmp.ne.s32.totalorder %s24, %s27
      %p33 = scmp.eq.s32.totalorder %s14, 0
      %p34 = por %p32, %p33
      %p35 = scmp.ne.s32.totalorder %s24, %s27
      %p36 = scmp.eq.s32.totalorder %s19, 1
      %p37 = por %p35, %p36
      %p38 = scmp.ne.s32.totalorder %s27, %s28
      %p39 = scmp.eq.s32.totalorder %s19, 0
      %p40 = por %p38, %p39
      %p41 = scmp.ne.s32.totalorder %s27, %s28
      %p42 = scmp.eq.s32.totalorder %s20, 1
      %p43 = por %p41, %p42
      %p45 = scmp.ne.s32.totalorder %s28, %s44
      %p46 = scmp.eq.s32.totalorder %s20, 0
      %p47 = por %p45, %p46
      %s49 = sadd.s32 %s48, 1
      %p52 = scmp.eq.s32.totalorder %s14, 1
      %p53 = scmp.ne.s32.totalorder %s48, %s50
      %p54 = scmp.eq.s32.totalorder %s14, 0
      %p55 = por %p53, %p54
      %p56 = scmp.ne.s32.totalorder %s48, %s50
      %p57 = scmp.eq.s32.totalorder %s19, 1
      %p58 = por %p56, %p57
      %p59 = scmp.ne.s32.totalorder %s50, %s51
      %p60 = scmp.eq.s32.totalorder %s19, 0
      %p61 = por %p59, %p60
      %p62 = scmp.ne.s32.totalorder %s50, %s51
      %p63 = scmp.eq.s32.totalorder %s20, 1
      %p64 = por %p62, %p63
      %p66 = scmp.ne.s32.totalorder %s51, %s65
      %p67 = scmp.eq.s32.totalorder %s20, 0
      %p68 = por %p66, %p67
      %s70 = sadd.s32 %s69, 1
      %p73 = scmp.eq.s32.totalorder %s14, 1
      %p74 = scmp.ne.s32.totalorder %s69, %s71
      %p75 = scmp.eq.s32.totalorder %s14, 0
      %p76 = por %p74, %p75
      %p77 = scmp.ne.s32.totalorder %s69, %s71
      %p78 = scmp.eq.s32.totalorder %s19, 1
      %p79 = por %p77, %p78
      %p80 = scmp.ne.s32.totalorder %s71, %s72
      %p81 = scmp.eq.s32.totalorder %s19, 0
      %p82 = por %p80, %p81
      %p83 = scmp.ne.s32.totalorder %s71, %s72
      %p84 = scmp.eq.s32.totalorder %s20, 1
      %p85 = por %p83, %p84
      %p87 = scmp.ne.s32.totalorder %s72, %s86
      %p88 = scmp.eq.s32.totalorder %s20, 0
      %p89 = por %p87, %p88
      %s90 = ssub.s32 %s14, %s21
      %p91 = scmp.eq.s32.totalorder %s90, 0
      %s93 = sadd.s32 %s92, 1
      %s94 = scalar_select %p91, %s92, %s93
      %p97 = pneg %p91
      %p98 = scmp.eq.s32.totalorder %s14, 1
      %p99 = por %p97, %p98
      %p100 = scmp.ne.s32.totalorder %s92, %s95
      %p101 = scmp.eq.s32.totalorder %s14, 0
      %p102 = por %p100, %p101
      %p103 = scmp.ne.s32.totalorder %s92, %s95
      %p104 = scmp.eq.s32.totalorder %s19, 1
      %p105 = por %p103, %p104
      %p106 = scmp.ne.s32.totalorder %s95, %s96
      %p107 = scmp.eq.s32.totalorder %s19, 0
      %p108 = por %p106, %p107
      %p109 = scmp.ne.s32.totalorder %s95, %s96
      %p110 = scmp.eq.s32.totalorder %s20, 1
      %p111 = por %p109, %p110
      %p113 = scmp.ne.s32.totalorder %s96, %s112
      %p114 = scmp.eq.s32.totalorder %s20, 0
      %p115 = por %p113, %p114
      %p116 = scmp.le.s32.totalorder 1, %s14
      %p117 = scmp.lt.s32.totalorder %s14, 3
      %p118 = pnand %p116, %p117
      %p119 = pneg %p118
      // Predicated region
      $region9: #{tpu_custom_call.1} parent=5 // pred_check
        _
      $region10: #{tpu_custom_call.1} parent=5 // pred_check_branch
        %121 = sbr.rel (%p118) target = $region12
      $region11: #{tpu_custom_call.1} parent=5 // pred_region
        %s122 = ssub.s32 %s14, 1
        // Predicated region
        $region13: #{tpu_custom_call.1} parent=11 // pred_check
          %p123 = pneg %p61
        $region14: #{tpu_custom_call.1} parent=11 // pred_check_branch
          %125 = sbr.rel (%p123) target = $region16
        $region15: #{tpu_custom_call.1} parent=11 // pred_region
          %s127 = ssub.s32 16, 16
          %128 = vsyncadd [#allocation5], %s127
          %s130 = sshll.u32 %s1, 4
          %s131 = int_to_ptr.vmem [resolvable:$true] %s130
          %133 = dma.vmem_to_smem %s131, 16, [#allocation3], [#allocation5]
        $region16: #{tpu_custom_call.1} parent=11 // pred_fallthru
          _
        // Predicated region
        $region17: #{tpu_custom_call.1} parent=11 // pred_check
          %p134 = pneg %p82
        $region18: #{tpu_custom_call.1} parent=11 // pred_check_branch
          %136 = sbr.rel (%p134) target = $region20
        $region19: #{tpu_custom_call.1} parent=11 // pred_region
          _
        $region20: #{tpu_custom_call.1} parent=11 // pred_fallthru
          _
      $region12: #{tpu_custom_call.1} parent=5 // pred_fallthru
        _
      %p137 = scmp.lt.s32.totalorder %s14, 2
      // Predicated region
      $region21: #{tpu_custom_call.1} parent=5 // pred_check
        %p138 = pneg %p137
      $region22: #{tpu_custom_call.1} parent=5 // pred_check_branch
        %140 = sbr.rel (%p138) target = $region24
      $region23: #{tpu_custom_call.1} parent=5 // pred_region
        // Predicated region
        $region25: #{tpu_custom_call.1} parent=23 // pred_check
          %p141 = pneg %p34
        $region26: #{tpu_custom_call.1} parent=23 // pred_check_branch
          %143 = sbr.rel (%p141) target = $region28
        $region27: #{tpu_custom_call.1} parent=23 // pred_region
          %p144 = scmp.lt.s32.totalorder %s14, 1
          %s145 = scalar_select %p144, %s14, 1
          %s146 = smul.addr %s145, 24
          %s147 = smul.addr %s146, 8
          %s148 = scalar_lea.vmem %s0, %s147
        $region28: #{tpu_custom_call.1} parent=23 // pred_fallthru
          _
      $region24: #{tpu_custom_call.1} parent=5 // pred_fallthru
        _
      %p149 = scmp.le.s32.totalorder 1, %s14
      %p150 = scmp.lt.s32.totalorder %s14, 3
      %p151 = pnand %p149, %p150
      %p152 = pneg %p151
      // Predicated region
      $region29: #{tpu_custom_call.1} parent=5 // pred_check
        _
      $region30: #{tpu_custom_call.1} parent=5 // pred_check_branch
        %154 = sbr.rel (%p151) target = $region32
      $region31: #{tpu_custom_call.1} parent=5 // pred_region
        %s155 = ssub.s32 %s14, 1
        // Predicated region
        $region33: #{tpu_custom_call.1} parent=31 // pred_check
          %p156 = pneg %p61
        $region34: #{tpu_custom_call.1} parent=31 // pred_check_branch
          %158 = sbr.rel (%p156) target = $region36
        $region35: #{tpu_custom_call.1} parent=31 // pred_region
          %159 = dma.done [#allocation5], 16
        $region36: #{tpu_custom_call.1} parent=31 // pred_fallthru
          _
        %160 = sfence
        %p161 = scmp.lt.s32.totalorder %s19, 1
        %s162 = scalar_select %p161, %s19, 1
        %s163 = smul.addr %s162, 24
        %s164 = smul.addr %s163, 8
        %s165 = scalar_lea.vmem %s0, %s164
        %p166 = pneg %p40
        %p167 = pneg %p37
        %p168 = pneg %p61
        %p169 = pneg %p58
        %p170 = pneg %p82
        %p171 = pneg %p79
        %p172 = pneg %p108
        %p173 = pneg %p105
        %s174 = sand.u32 %s95, 1
        %s175 = scalar_lea.sflag [#allocation4], %s174
        %s176 = sand.u32 %s95, 1
        %s177 = smul.addr %s176, 16
        %s178 = scalar_lea.vmem [#allocation6], %s177
        %p179 = scmp.lt.s32.totalorder %s19, 1
        %s180 = scalar_select %p179, %s19, 1
        %s181 = smul.addr %s180, 24
        %s182 = smul.addr %s181, 8
        %s183 = scalar_lea.vmem %s0, %s182
        %s184 = sld [smem:[#allocation2]]
        %v185 = vstv %s184
        %v186 = vld [vmem:[%s183] sm:$0xff]
        %v187 = vld [vmem:[%s183 + $0x8] sm:$0xff]
        %v188 = vld [vmem:[%s183 + $0x18] sm:$0xff]
        %v189 = vld [vmem:[%s183 + $0x20] sm:$0xff]
        %v190 = vld [vmem:[%s183 + $0x30] sm:$0xff]
        %v191 = vld [vmem:[%s183 + $0x38] sm:$0xff]
        %v192 = vld [vmem:[%s183 + $0x48] sm:$0xff]
        %v193 = vld [vmem:[%s183 + $0x50] sm:$0xff]
        %v194 = vld [vmem:[%s183 + $0x60] sm:$0xff]
        %v195 = vld [vmem:[%s183 + $0x68] sm:$0xff]
        %v196 = vld [vmem:[%s183 + $0x78] sm:$0xff]
        %v197 = vld [vmem:[%s183 + $0x80] sm:$0xff]
        %v198 = vld [vmem:[%s183 + $0x90] sm:$0xff]
        %v199 = vld [vmem:[%s183 + $0x98] sm:$0xff]
        %v200 = vld [vmem:[%s183 + $0xa8] sm:$0xff]
        %v201 = vld [vmem:[%s183 + $0xb0] sm:$0xff]
        %s202 = sld [smem:[#allocation3]]
        %v203 = vstv %s202
        %v204 = vmul.f32 %v203, %v186
        %v205 = vmul.f32 %v203, %v187
        %v206 = vadd.f32 %v185, %v204
        %v207 = vadd.f32 %v185, %v205
        %s208 = sld [smem:[#allocation3 + $0x9]]
        %v209 = vstv %s208
        %v210 = vmul.f32 %v209, %v188
        %v211 = vmul.f32 %v209, %v189
        %v212 = vadd.f32 %v206, %v210
        %v213 = vadd.f32 %v207, %v211
        %s214 = sld [smem:[#allocation3 + $0x12]]
        %v215 = vstv %s214
        %v216 = vmul.f32 %v215, %v190
        %v217 = vmul.f32 %v215, %v191
        %v218 = vadd.f32 %v212, %v216
        %v219 = vadd.f32 %v213, %v217
        %s220 = sld [smem:[#allocation3 + $0x1b]]
        %v221 = vstv %s220
        %v222 = vmul.f32 %v221, %v192
        %v223 = vmul.f32 %v221, %v193
        %v224 = vadd.f32 %v218, %v222
        %v225 = vadd.f32 %v219, %v223
        %s226 = sld [smem:[#allocation3 + $0x24]]
        %v227 = vstv %s226
        %v228 = vmul.f32 %v227, %v194
        %v229 = vmul.f32 %v227, %v195
        %v230 = vadd.f32 %v224, %v228
        %v231 = vadd.f32 %v225, %v229
        %s232 = sld [smem:[#allocation3 + $0x2d]]
        %v233 = vstv %s232
        %v234 = vmul.f32 %v233, %v196
        %v235 = vmul.f32 %v233, %v197
        %v236 = vadd.f32 %v230, %v234
        %v237 = vadd.f32 %v231, %v235
        %s238 = sld [smem:[#allocation3 + $0x36]]
        %v239 = vstv %s238
        %v240 = vmul.f32 %v239, %v198
        %v241 = vmul.f32 %v239, %v199
        %v242 = vadd.f32 %v236, %v240
        %v243 = vadd.f32 %v237, %v241
        %s244 = sld [smem:[#allocation3 + $0x3f]]
        %v245 = vstv %s244
        %v246 = vmul.f32 %v245, %v200
        %v247 = vmul.f32 %v245, %v201
        %v248 = vadd.f32 %v242, %v246
        %v249 = vadd.f32 %v243, %v247
        %s250 = sld [smem:[#allocation3 + $0x1]]
        %v251 = vstv %s250
        %v252 = vmul.f32 %v251, %v186
        %v253 = vmul.f32 %v251, %v187
        %256 = vrot.lane.b32.xlu0 %v252, 127
        %v257 = vpop.permute.xlu0 %256
        %258 = vrot.lane.b32.xlu0 %v253, 127
        %v259 = vpop.permute.xlu0 %258
        %v262 = vadd.f32 %v248, %v257
        %v263 = vadd.f32 %v249, %v259
        %s264 = sld [smem:[#allocation3 + $0xa]]
        %v265 = vstv %s264
        %v266 = vmul.f32 %v265, %v188
        %v267 = vmul.f32 %v265, %v189
        %270 = vrot.lane.b32.xlu0 %v266, 127
        %v271 = vpop.permute.xlu0 %270
        %272 = vrot.lane.b32.xlu0 %v267, 127
        %v273 = vpop.permute.xlu0 %272
        %v276 = vadd.f32 %v262, %v271
        %v277 = vadd.f32 %v263, %v273
        %s278 = sld [smem:[#allocation3 + $0x13]]
        %v279 = vstv %s278
        %v280 = vmul.f32 %v279, %v190
        %v281 = vmul.f32 %v279, %v191
        %284 = vrot.lane.b32.xlu0 %v280, 127
        %v285 = vpop.permute.xlu0 %284
        %286 = vrot.lane.b32.xlu0 %v281, 127
        %v287 = vpop.permute.xlu0 %286
        %v290 = vadd.f32 %v276, %v285
        %v291 = vadd.f32 %v277, %v287
        %s292 = sld [smem:[#allocation3 + $0x1c]]
        %v293 = vstv %s292
        %v294 = vmul.f32 %v293, %v192
        %v295 = vmul.f32 %v293, %v193
        %298 = vrot.lane.b32.xlu0 %v294, 127
        %v299 = vpop.permute.xlu0 %298
        %300 = vrot.lane.b32.xlu0 %v295, 127
        %v301 = vpop.permute.xlu0 %300
        %v304 = vadd.f32 %v290, %v299
        %v305 = vadd.f32 %v291, %v301
        %s306 = sld [smem:[#allocation3 + $0x25]]
        %v307 = vstv %s306
        %v308 = vmul.f32 %v307, %v194
        %v309 = vmul.f32 %v307, %v195
        %312 = vrot.lane.b32.xlu0 %v308, 127
        %v313 = vpop.permute.xlu0 %312
        %314 = vrot.lane.b32.xlu0 %v309, 127
        %v315 = vpop.permute.xlu0 %314
        %v318 = vadd.f32 %v304, %v313
        %v319 = vadd.f32 %v305, %v315
        %s320 = sld [smem:[#allocation3 + $0x2e]]
        %v321 = vstv %s320
        %v322 = vmul.f32 %v321, %v196
        %v323 = vmul.f32 %v321, %v197
        %326 = vrot.lane.b32.xlu0 %v322, 127
        %v327 = vpop.permute.xlu0 %326
        %328 = vrot.lane.b32.xlu0 %v323, 127
        %v329 = vpop.permute.xlu0 %328
        %v332 = vadd.f32 %v318, %v327
        %v333 = vadd.f32 %v319, %v329
        %s334 = sld [smem:[#allocation3 + $0x37]]
        %v335 = vstv %s334
        %v336 = vmul.f32 %v335, %v198
        %v337 = vmul.f32 %v335, %v199
        %340 = vrot.lane.b32.xlu0 %v336, 127
        %v341 = vpop.permute.xlu0 %340
        %342 = vrot.lane.b32.xlu0 %v337, 127
        %v343 = vpop.permute.xlu0 %342
        %v346 = vadd.f32 %v332, %v341
        %v347 = vadd.f32 %v333, %v343
        %s348 = sld [smem:[#allocation3 + $0x40]]
        %v349 = vstv %s348
        %v350 = vmul.f32 %v349, %v200
        %v351 = vmul.f32 %v349, %v201
        %354 = vrot.lane.b32.xlu0 %v350, 127
        %v355 = vpop.permute.xlu0 %354
        %356 = vrot.lane.b32.xlu0 %v351, 127
        %v357 = vpop.permute.xlu0 %356
        %v360 = vadd.f32 %v346, %v355
        %v361 = vadd.f32 %v347, %v357
        %s362 = sld [smem:[#allocation3 + $0x2]]
        %v363 = vstv %s362
        %v364 = vmul.f32 %v363, %v186
        %v365 = vmul.f32 %v363, %v187
        %368 = vrot.lane.b32.xlu0 %v364, 126
        %v369 = vpop.permute.xlu0 %368
        %370 = vrot.lane.b32.xlu0 %v365, 126
        %v371 = vpop.permute.xlu0 %370
        %v374 = vadd.f32 %v360, %v369
        %v375 = vadd.f32 %v361, %v371
        %s376 = sld [smem:[#allocation3 + $0xb]]
        %v377 = vstv %s376
        %v378 = vmul.f32 %v377, %v188
        %v379 = vmul.f32 %v377, %v189
        %382 = vrot.lane.b32.xlu0 %v378, 126
        %v383 = vpop.permute.xlu0 %382
        %384 = vrot.lane.b32.xlu0 %v379, 126
        %v385 = vpop.permute.xlu0 %384
        %v388 = vadd.f32 %v374, %v383
        %v389 = vadd.f32 %v375, %v385
        %s390 = sld [smem:[#allocation3 + $0x14]]
        %v391 = vstv %s390
        %v392 = vmul.f32 %v391, %v190
        %v393 = vmul.f32 %v391, %v191
        %396 = vrot.lane.b32.xlu0 %v392, 126
        %v397 = vpop.permute.xlu0 %396
        %398 = vrot.lane.b32.xlu0 %v393, 126
        %v399 = vpop.permute.xlu0 %398
        %v402 = vadd.f32 %v388, %v397
        %v403 = vadd.f32 %v389, %v399
        %s404 = sld [smem:[#allocation3 + $0x1d]]
        %v405 = vstv %s404
        %v406 = vmul.f32 %v405, %v192
        %v407 = vmul.f32 %v405, %v193
        %410 = vrot.lane.b32.xlu0 %v406, 126
        %v411 = vpop.permute.xlu0 %410
        %412 = vrot.lane.b32.xlu0 %v407, 126
        %v413 = vpop.permute.xlu0 %412
        %v416 = vadd.f32 %v402, %v411
        %v417 = vadd.f32 %v403, %v413
        %s418 = sld [smem:[#allocation3 + $0x26]]
        %v419 = vstv %s418
        %v420 = vmul.f32 %v419, %v194
        %v421 = vmul.f32 %v419, %v195
        %424 = vrot.lane.b32.xlu0 %v420, 126
        %v425 = vpop.permute.xlu0 %424
        %426 = vrot.lane.b32.xlu0 %v421, 126
        %v427 = vpop.permute.xlu0 %426
        %v430 = vadd.f32 %v416, %v425
        %v431 = vadd.f32 %v417, %v427
        %s432 = sld [smem:[#allocation3 + $0x2f]]
        %v433 = vstv %s432
        %v434 = vmul.f32 %v433, %v196
        %v435 = vmul.f32 %v433, %v197
        %438 = vrot.lane.b32.xlu0 %v434, 126
        %v439 = vpop.permute.xlu0 %438
        %440 = vrot.lane.b32.xlu0 %v435, 126
        %v441 = vpop.permute.xlu0 %440
        %v444 = vadd.f32 %v430, %v439
        %v445 = vadd.f32 %v431, %v441
        %s446 = sld [smem:[#allocation3 + $0x38]]
        %v447 = vstv %s446
        %v448 = vmul.f32 %v447, %v198
        %v449 = vmul.f32 %v447, %v199
        %452 = vrot.lane.b32.xlu0 %v448, 126
        %v453 = vpop.permute.xlu0 %452
        %454 = vrot.lane.b32.xlu0 %v449, 126
        %v455 = vpop.permute.xlu0 %454
        %v458 = vadd.f32 %v444, %v453
        %v459 = vadd.f32 %v445, %v455
        %s460 = sld [smem:[#allocation3 + $0x41]]
        %v461 = vstv %s460
        %v462 = vmul.f32 %v461, %v200
        %v463 = vmul.f32 %v461, %v201
        %466 = vrot.lane.b32.xlu0 %v462, 126
        %v467 = vpop.permute.xlu0 %466
        %468 = vrot.lane.b32.xlu0 %v463, 126
        %v469 = vpop.permute.xlu0 %468
        %v472 = vadd.f32 %v458, %v467
        %v473 = vadd.f32 %v459, %v469
        %v474 = vld [vmem:[%s183 + $0x1] sm:$0xff]
        %v475 = vld [vmem:[%s183 + $0x9] sm:$0xff]
        %v476 = vld [vmem:[%s183 + $0x19] sm:$0xff]
        %v477 = vld [vmem:[%s183 + $0x21] sm:$0xff]
        %v478 = vld [vmem:[%s183 + $0x31] sm:$0xff]
        %v479 = vld [vmem:[%s183 + $0x39] sm:$0xff]
        %v480 = vld [vmem:[%s183 + $0x49] sm:$0xff]
        %v481 = vld [vmem:[%s183 + $0x51] sm:$0xff]
        %v482 = vld [vmem:[%s183 + $0x61] sm:$0xff]
        %v483 = vld [vmem:[%s183 + $0x69] sm:$0xff]
        %v484 = vld [vmem:[%s183 + $0x79] sm:$0xff]
        %v485 = vld [vmem:[%s183 + $0x81] sm:$0xff]
        %v486 = vld [vmem:[%s183 + $0x91] sm:$0xff]
        %v487 = vld [vmem:[%s183 + $0x99] sm:$0xff]
        %v488 = vld [vmem:[%s183 + $0xa9] sm:$0xff]
        %v489 = vld [vmem:[%s183 + $0xb1] sm:$0xff]
        %s490 = sld [smem:[#allocation3 + $0x3]]
        %v491 = vstv %s490
        %v492 = vmul.f32 %v491, %v474
        %v493 = vmul.f32 %v491, %v475
        %v494 = vadd.f32 %v472, %v492
        %v495 = vadd.f32 %v473, %v493
        %s496 = sld [smem:[#allocation3 + $0xc]]
        %v497 = vstv %s496
        %v498 = vmul.f32 %v497, %v476
        %v499 = vmul.f32 %v497, %v477
        %v500 = vadd.f32 %v494, %v498
        %v501 = vadd.f32 %v495, %v499
        %s502 = sld [smem:[#allocation3 + $0x15]]
        %v503 = vstv %s502
        %v504 = vmul.f32 %v503, %v478
        %v505 = vmul.f32 %v503, %v479
        %v506 = vadd.f32 %v500, %v504
        %v507 = vadd.f32 %v501, %v505
        %s508 = sld [smem:[#allocation3 + $0x1e]]
        %v509 = vstv %s508
        %v510 = vmul.f32 %v509, %v480
        %v511 = vmul.f32 %v509, %v481
        %v512 = vadd.f32 %v506, %v510
        %v513 = vadd.f32 %v507, %v511
        %s514 = sld [smem:[#allocation3 + $0x27]]
        %v515 = vstv %s514
        %v516 = vmul.f32 %v515, %v482
        %v517 = vmul.f32 %v515, %v483
        %v518 = vadd.f32 %v512, %v516
        %v519 = vadd.f32 %v513, %v517
        %s520 = sld [smem:[#allocation3 + $0x30]]
        %v521 = vstv %s520
        %v522 = vmul.f32 %v521, %v484
        %v523 = vmul.f32 %v521, %v485
        %v524 = vadd.f32 %v518, %v522
        %v525 = vadd.f32 %v519, %v523
        %s526 = sld [smem:[#allocation3 + $0x39]]
        %v527 = vstv %s526
        %v528 = vmul.f32 %v527, %v486
        %v529 = vmul.f32 %v527, %v487
        %v530 = vadd.f32 %v524, %v528
        %v531 = vadd.f32 %v525, %v529
        %s532 = sld [smem:[#allocation3 + $0x42]]
        %v533 = vstv %s532
        %v534 = vmul.f32 %v533, %v488
        %v535 = vmul.f32 %v533, %v489
        %v536 = vadd.f32 %v530, %v534
        %v537 = vadd.f32 %v531, %v535
        %s538 = sld [smem:[#allocation3 + $0x4]]
        %v539 = vstv %s538
        %v540 = vmul.f32 %v539, %v474
        %v541 = vmul.f32 %v539, %v475
        %544 = vrot.lane.b32.xlu0 %v540, 127
        %v545 = vpop.permute.xlu0 %544
        %546 = vrot.lane.b32.xlu0 %v541, 127
        %v547 = vpop.permute.xlu0 %546
        %v550 = vadd.f32 %v536, %v545
        %v551 = vadd.f32 %v537, %v547
        %s552 = sld [smem:[#allocation3 + $0xd]]
        %v553 = vstv %s552
        %v554 = vmul.f32 %v553, %v476
        %v555 = vmul.f32 %v553, %v477
        %558 = vrot.lane.b32.xlu0 %v554, 127
        %v559 = vpop.permute.xlu0 %558
        %560 = vrot.lane.b32.xlu0 %v555, 127
        %v561 = vpop.permute.xlu0 %560
        %v564 = vadd.f32 %v550, %v559
        %v565 = vadd.f32 %v551, %v561
        %s566 = sld [smem:[#allocation3 + $0x16]]
        %v567 = vstv %s566
        %v568 = vmul.f32 %v567, %v478
        %v569 = vmul.f32 %v567, %v479
        %572 = vrot.lane.b32.xlu0 %v568, 127
        %v573 = vpop.permute.xlu0 %572
        %574 = vrot.lane.b32.xlu0 %v569, 127
        %v575 = vpop.permute.xlu0 %574
        %v578 = vadd.f32 %v564, %v573
        %v579 = vadd.f32 %v565, %v575
        %s580 = sld [smem:[#allocation3 + $0x1f]]
        %v581 = vstv %s580
        %v582 = vmul.f32 %v581, %v480
        %v583 = vmul.f32 %v581, %v481
        %586 = vrot.lane.b32.xlu0 %v582, 127
        %v587 = vpop.permute.xlu0 %586
        %588 = vrot.lane.b32.xlu0 %v583, 127
        %v589 = vpop.permute.xlu0 %588
        %v592 = vadd.f32 %v578, %v587
        %v593 = vadd.f32 %v579, %v589
        %s594 = sld [smem:[#allocation3 + $0x28]]
        %v595 = vstv %s594
        %v596 = vmul.f32 %v595, %v482
        %v597 = vmul.f32 %v595, %v483
        %600 = vrot.lane.b32.xlu0 %v596, 127
        %v601 = vpop.permute.xlu0 %600
        %602 = vrot.lane.b32.xlu0 %v597, 127
        %v603 = vpop.permute.xlu0 %602
        %v606 = vadd.f32 %v592, %v601
        %v607 = vadd.f32 %v593, %v603
        %s608 = sld [smem:[#allocation3 + $0x31]]
        %v609 = vstv %s608
        %v610 = vmul.f32 %v609, %v484
        %v611 = vmul.f32 %v609, %v485
        %614 = vrot.lane.b32.xlu0 %v610, 127
        %v615 = vpop.permute.xlu0 %614
        %616 = vrot.lane.b32.xlu0 %v611, 127
        %v617 = vpop.permute.xlu0 %616
        %v620 = vadd.f32 %v606, %v615
        %v621 = vadd.f32 %v607, %v617
        %s622 = sld [smem:[#allocation3 + $0x3a]]
        %v623 = vstv %s622
        %v624 = vmul.f32 %v623, %v486
        %v625 = vmul.f32 %v623, %v487
        %628 = vrot.lane.b32.xlu0 %v624, 127
        %v629 = vpop.permute.xlu0 %628
        %630 = vrot.lane.b32.xlu0 %v625, 127
        %v631 = vpop.permute.xlu0 %630
        %v634 = vadd.f32 %v620, %v629
        %v635 = vadd.f32 %v621, %v631
        %s636 = sld [smem:[#allocation3 + $0x43]]
        %v637 = vstv %s636
        %v638 = vmul.f32 %v637, %v488
        %v639 = vmul.f32 %v637, %v489
        %642 = vrot.lane.b32.xlu0 %v638, 127
        %v643 = vpop.permute.xlu0 %642
        %644 = vrot.lane.b32.xlu0 %v639, 127
        %v645 = vpop.permute.xlu0 %644
        %v648 = vadd.f32 %v634, %v643
        %v649 = vadd.f32 %v635, %v645
        %s650 = sld [smem:[#allocation3 + $0x5]]
        %v651 = vstv %s650
        %v652 = vmul.f32 %v651, %v474
        %v653 = vmul.f32 %v651, %v475
        %656 = vrot.lane.b32.xlu0 %v652, 126
        %v657 = vpop.permute.xlu0 %656
        %658 = vrot.lane.b32.xlu0 %v653, 126
        %v659 = vpop.permute.xlu0 %658
        %v662 = vadd.f32 %v648, %v657
        %v663 = vadd.f32 %v649, %v659
        %s664 = sld [smem:[#allocation3 + $0xe]]
        %v665 = vstv %s664
        %v666 = vmul.f32 %v665, %v476
        %v667 = vmul.f32 %v665, %v477
        %670 = vrot.lane.b32.xlu0 %v666, 126
        %v671 = vpop.permute.xlu0 %670
        %672 = vrot.lane.b32.xlu0 %v667, 126
        %v673 = vpop.permute.xlu0 %672
        %v676 = vadd.f32 %v662, %v671
        %v677 = vadd.f32 %v663, %v673
        %s678 = sld [smem:[#allocation3 + $0x17]]
        %v679 = vstv %s678
        %v680 = vmul.f32 %v679, %v478
        %v681 = vmul.f32 %v679, %v479
        %684 = vrot.lane.b32.xlu0 %v680, 126
        %v685 = vpop.permute.xlu0 %684
        %686 = vrot.lane.b32.xlu0 %v681, 126
        %v687 = vpop.permute.xlu0 %686
        %v690 = vadd.f32 %v676, %v685
        %v691 = vadd.f32 %v677, %v687
        %s692 = sld [smem:[#allocation3 + $0x20]]
        %v693 = vstv %s692
        %v694 = vmul.f32 %v693, %v480
        %v695 = vmul.f32 %v693, %v481
        %698 = vrot.lane.b32.xlu0 %v694, 126
        %v699 = vpop.permute.xlu0 %698
        %700 = vrot.lane.b32.xlu0 %v695, 126
        %v701 = vpop.permute.xlu0 %700
        %v704 = vadd.f32 %v690, %v699
        %v705 = vadd.f32 %v691, %v701
        %s706 = sld [smem:[#allocation3 + $0x29]]
        %v707 = vstv %s706
        %v708 = vmul.f32 %v707, %v482
        %v709 = vmul.f32 %v707, %v483
        %712 = vrot.lane.b32.xlu0 %v708, 126
        %v713 = vpop.permute.xlu0 %712
        %714 = vrot.lane.b32.xlu0 %v709, 126
        %v715 = vpop.permute.xlu0 %714
        %v718 = vadd.f32 %v704, %v713
        %v719 = vadd.f32 %v705, %v715
        %s720 = sld [smem:[#allocation3 + $0x32]]
        %v721 = vstv %s720
        %v722 = vmul.f32 %v721, %v484
        %v723 = vmul.f32 %v721, %v485
        %726 = vrot.lane.b32.xlu0 %v722, 126
        %v727 = vpop.permute.xlu0 %726
        %728 = vrot.lane.b32.xlu0 %v723, 126
        %v729 = vpop.permute.xlu0 %728
        %v732 = vadd.f32 %v718, %v727
        %v733 = vadd.f32 %v719, %v729
        %s734 = sld [smem:[#allocation3 + $0x3b]]
        %v735 = vstv %s734
        %v736 = vmul.f32 %v735, %v486
        %v737 = vmul.f32 %v735, %v487
        %740 = vrot.lane.b32.xlu0 %v736, 126
        %v741 = vpop.permute.xlu0 %740
        %742 = vrot.lane.b32.xlu0 %v737, 126
        %v743 = vpop.permute.xlu0 %742
        %v746 = vadd.f32 %v732, %v741
        %v747 = vadd.f32 %v733, %v743
        %s748 = sld [smem:[#allocation3 + $0x44]]
        %v749 = vstv %s748
        %v750 = vmul.f32 %v749, %v488
        %v751 = vmul.f32 %v749, %v489
        %754 = vrot.lane.b32.xlu0 %v750, 126
        %v755 = vpop.permute.xlu0 %754
        %756 = vrot.lane.b32.xlu0 %v751, 126
        %v757 = vpop.permute.xlu0 %756
        %v760 = vadd.f32 %v746, %v755
        %v761 = vadd.f32 %v747, %v757
        %v762 = vld [vmem:[%s183 + $0x2] sm:$0xff]
        %v763 = vld [vmem:[%s183 + $0xa] sm:$0xff]
        %v764 = vld [vmem:[%s183 + $0x1a] sm:$0xff]
        %v765 = vld [vmem:[%s183 + $0x22] sm:$0xff]
        %v766 = vld [vmem:[%s183 + $0x32] sm:$0xff]
        %v767 = vld [vmem:[%s183 + $0x3a] sm:$0xff]
        %v768 = vld [vmem:[%s183 + $0x4a] sm:$0xff]
        %v769 = vld [vmem:[%s183 + $0x52] sm:$0xff]
        %v770 = vld [vmem:[%s183 + $0x62] sm:$0xff]
        %v771 = vld [vmem:[%s183 + $0x6a] sm:$0xff]
        %v772 = vld [vmem:[%s183 + $0x7a] sm:$0xff]
        %v773 = vld [vmem:[%s183 + $0x82] sm:$0xff]
        %v774 = vld [vmem:[%s183 + $0x92] sm:$0xff]
        %v775 = vld [vmem:[%s183 + $0x9a] sm:$0xff]
        %v776 = vld [vmem:[%s183 + $0xaa] sm:$0xff]
        %v777 = vld [vmem:[%s183 + $0xb2] sm:$0xff]
        %s778 = sld [smem:[#allocation3 + $0x6]]
        %v779 = vstv %s778
        %v780 = vmul.f32 %v779, %v762
        %v781 = vmul.f32 %v779, %v763
        %v782 = vadd.f32 %v760, %v780
        %v783 = vadd.f32 %v761, %v781
        %s784 = sld [smem:[#allocation3 + $0xf]]
        %v785 = vstv %s784
        %v786 = vmul.f32 %v785, %v764
        %v787 = vmul.f32 %v785, %v765
        %v788 = vadd.f32 %v782, %v786
        %v789 = vadd.f32 %v783, %v787
        %s790 = sld [smem:[#allocation3 + $0x18]]
        %v791 = vstv %s790
        %v792 = vmul.f32 %v791, %v766
        %v793 = vmul.f32 %v791, %v767
        %v794 = vadd.f32 %v788, %v792
        %v795 = vadd.f32 %v789, %v793
        %s796 = sld [smem:[#allocation3 + $0x21]]
        %v797 = vstv %s796
        %v798 = vmul.f32 %v797, %v768
        %v799 = vmul.f32 %v797, %v769
        %v800 = vadd.f32 %v794, %v798
        %v801 = vadd.f32 %v795, %v799
        %s802 = sld [smem:[#allocation3 + $0x2a]]
        %v803 = vstv %s802
        %v804 = vmul.f32 %v803, %v770
        %v805 = vmul.f32 %v803, %v771
        %v806 = vadd.f32 %v800, %v804
        %v807 = vadd.f32 %v801, %v805
        %s808 = sld [smem:[#allocation3 + $0x33]]
        %v809 = vstv %s808
        %v810 = vmul.f32 %v809, %v772
        %v811 = vmul.f32 %v809, %v773
        %v812 = vadd.f32 %v806, %v810
        %v813 = vadd.f32 %v807, %v811
        %s814 = sld [smem:[#allocation3 + $0x3c]]
        %v815 = vstv %s814
        %v816 = vmul.f32 %v815, %v774
        %v817 = vmul.f32 %v815, %v775
        %v818 = vadd.f32 %v812, %v816
        %v819 = vadd.f32 %v813, %v817
        %s820 = sld [smem:[#allocation3 + $0x45]]
        %v821 = vstv %s820
        %v822 = vmul.f32 %v821, %v776
        %v823 = vmul.f32 %v821, %v777
        %v824 = vadd.f32 %v818, %v822
        %v825 = vadd.f32 %v819, %v823
        %s826 = sld [smem:[#allocation3 + $0x7]]
        %v827 = vstv %s826
        %v828 = vmul.f32 %v827, %v762
        %v829 = vmul.f32 %v827, %v763
        %832 = vrot.lane.b32.xlu0 %v828, 127
        %v833 = vpop.permute.xlu0 %832
        %834 = vrot.lane.b32.xlu0 %v829, 127
        %v835 = vpop.permute.xlu0 %834
        %v838 = vadd.f32 %v824, %v833
        %v839 = vadd.f32 %v825, %v835
        %s840 = sld [smem:[#allocation3 + $0x10]]
        %v841 = vstv %s840
        %v842 = vmul.f32 %v841, %v764
        %v843 = vmul.f32 %v841, %v765
        %846 = vrot.lane.b32.xlu0 %v842, 127
        %v847 = vpop.permute.xlu0 %846
        %848 = vrot.lane.b32.xlu0 %v843, 127
        %v849 = vpop.permute.xlu0 %848
        %v852 = vadd.f32 %v838, %v847
        %v853 = vadd.f32 %v839, %v849
        %s854 = sld [smem:[#allocation3 + $0x19]]
        %v855 = vstv %s854
        %v856 = vmul.f32 %v855, %v766
        %v857 = vmul.f32 %v855, %v767
        %860 = vrot.lane.b32.xlu0 %v856, 127
        %v861 = vpop.permute.xlu0 %860
        %862 = vrot.lane.b32.xlu0 %v857, 127
        %v863 = vpop.permute.xlu0 %862
        %v866 = vadd.f32 %v852, %v861
        %v867 = vadd.f32 %v853, %v863
        %s868 = sld [smem:[#allocation3 + $0x22]]
        %v869 = vstv %s868
        %v870 = vmul.f32 %v869, %v768
        %v871 = vmul.f32 %v869, %v769
        %874 = vrot.lane.b32.xlu0 %v870, 127
        %v875 = vpop.permute.xlu0 %874
        %876 = vrot.lane.b32.xlu0 %v871, 127
        %v877 = vpop.permute.xlu0 %876
        %v880 = vadd.f32 %v866, %v875
        %v881 = vadd.f32 %v867, %v877
        %s882 = sld [smem:[#allocation3 + $0x2b]]
        %v883 = vstv %s882
        %v884 = vmul.f32 %v883, %v770
        %v885 = vmul.f32 %v883, %v771
        %888 = vrot.lane.b32.xlu0 %v884, 127
        %v889 = vpop.permute.xlu0 %888
        %890 = vrot.lane.b32.xlu0 %v885, 127
        %v891 = vpop.permute.xlu0 %890
        %v894 = vadd.f32 %v880, %v889
        %v895 = vadd.f32 %v881, %v891
        %s896 = sld [smem:[#allocation3 + $0x34]]
        %v897 = vstv %s896
        %v898 = vmul.f32 %v897, %v772
        %v899 = vmul.f32 %v897, %v773
        %902 = vrot.lane.b32.xlu0 %v898, 127
        %v903 = vpop.permute.xlu0 %902
        %904 = vrot.lane.b32.xlu0 %v899, 127
        %v905 = vpop.permute.xlu0 %904
        %v908 = vadd.f32 %v894, %v903
        %v909 = vadd.f32 %v895, %v905
        %s910 = sld [smem:[#allocation3 + $0x3d]]
        %v911 = vstv %s910
        %v912 = vmul.f32 %v911, %v774
        %v913 = vmul.f32 %v911, %v775
        %916 = vrot.lane.b32.xlu0 %v912, 127
        %v917 = vpop.permute.xlu0 %916
        %918 = vrot.lane.b32.xlu0 %v913, 127
        %v919 = vpop.permute.xlu0 %918
        %v922 = vadd.f32 %v908, %v917
        %v923 = vadd.f32 %v909, %v919
        %s924 = sld [smem:[#allocation3 + $0x46]]
        %v925 = vstv %s924
        %v926 = vmul.f32 %v925, %v776
        %v927 = vmul.f32 %v925, %v777
        %930 = vrot.lane.b32.xlu0 %v926, 127
        %v931 = vpop.permute.xlu0 %930
        %932 = vrot.lane.b32.xlu0 %v927, 127
        %v933 = vpop.permute.xlu0 %932
        %v936 = vadd.f32 %v922, %v931
        %v937 = vadd.f32 %v923, %v933
        %s938 = sld [smem:[#allocation3 + $0x8]]
        %v939 = vstv %s938
        %v940 = vmul.f32 %v939, %v762
        %v941 = vmul.f32 %v939, %v763
        %944 = vrot.lane.b32.xlu0 %v940, 126
        %v945 = vpop.permute.xlu0 %944
        %946 = vrot.lane.b32.xlu0 %v941, 126
        %v947 = vpop.permute.xlu0 %946
        %v950 = vadd.f32 %v936, %v945
        %v951 = vadd.f32 %v937, %v947
        %s952 = sld [smem:[#allocation3 + $0x11]]
        %v953 = vstv %s952
        %v954 = vmul.f32 %v953, %v764
        %v955 = vmul.f32 %v953, %v765
        %958 = vrot.lane.b32.xlu0 %v954, 126
        %v959 = vpop.permute.xlu0 %958
        %960 = vrot.lane.b32.xlu0 %v955, 126
        %v961 = vpop.permute.xlu0 %960
        %v964 = vadd.f32 %v950, %v959
        %v965 = vadd.f32 %v951, %v961
        %s966 = sld [smem:[#allocation3 + $0x1a]]
        %v967 = vstv %s966
        %v968 = vmul.f32 %v967, %v766
        %v969 = vmul.f32 %v967, %v767
        %972 = vrot.lane.b32.xlu0 %v968, 126
        %v973 = vpop.permute.xlu0 %972
        %974 = vrot.lane.b32.xlu0 %v969, 126
        %v975 = vpop.permute.xlu0 %974
        %v978 = vadd.f32 %v964, %v973
        %v979 = vadd.f32 %v965, %v975
        %s980 = sld [smem:[#allocation3 + $0x23]]
        %v981 = vstv %s980
        %v982 = vmul.f32 %v981, %v768
        %v983 = vmul.f32 %v981, %v769
        %986 = vrot.lane.b32.xlu0 %v982, 126
        %v987 = vpop.permute.xlu0 %986
        %988 = vrot.lane.b32.xlu0 %v983, 126
        %v989 = vpop.permute.xlu0 %988
        %v992 = vadd.f32 %v978, %v987
        %v993 = vadd.f32 %v979, %v989
        %s994 = sld [smem:[#allocation3 + $0x2c]]
        %v995 = vstv %s994
        %v996 = vmul.f32 %v995, %v770
        %v997 = vmul.f32 %v995, %v771
        %1000 = vrot.lane.b32.xlu0 %v996, 126
        %v1001 = vpop.permute.xlu0 %1000
        %1002 = vrot.lane.b32.xlu0 %v997, 126
        %v1003 = vpop.permute.xlu0 %1002
        %v1006 = vadd.f32 %v992, %v1001
        %v1007 = vadd.f32 %v993, %v1003
        %s1008 = sld [smem:[#allocation3 + $0x35]]
        %v1009 = vstv %s1008
        %v1010 = vmul.f32 %v1009, %v772
        %v1011 = vmul.f32 %v1009, %v773
        %1014 = vrot.lane.b32.xlu0 %v1010, 126
        %v1015 = vpop.permute.xlu0 %1014
        %1016 = vrot.lane.b32.xlu0 %v1011, 126
        %v1017 = vpop.permute.xlu0 %1016
        %v1020 = vadd.f32 %v1006, %v1015
        %v1021 = vadd.f32 %v1007, %v1017
        %s1022 = sld [smem:[#allocation3 + $0x3e]]
        %v1023 = vstv %s1022
        %v1024 = vmul.f32 %v1023, %v774
        %v1025 = vmul.f32 %v1023, %v775
        %1028 = vrot.lane.b32.xlu0 %v1024, 126
        %v1029 = vpop.permute.xlu0 %1028
        %1030 = vrot.lane.b32.xlu0 %v1025, 126
        %v1031 = vpop.permute.xlu0 %1030
        %v1034 = vadd.f32 %v1020, %v1029
        %v1035 = vadd.f32 %v1021, %v1031
        %s1036 = sld [smem:[#allocation3 + $0x47]]
        %v1037 = vstv %s1036
        %v1038 = vmul.f32 %v1037, %v776
        %v1039 = vmul.f32 %v1037, %v777
        %1042 = vrot.lane.b32.xlu0 %v1038, 126
        %v1043 = vpop.permute.xlu0 %1042
        %1044 = vrot.lane.b32.xlu0 %v1039, 126
        %v1045 = vpop.permute.xlu0 %1044
        %v1048 = vadd.f32 %v1034, %v1043
        %v1049 = vadd.f32 %v1035, %v1045
        %v1050 = vxor.u32 %v1048, 2147483648
        %v1051 = vxor.u32 %v1049, 2147483648
        %v1052 = vmul.f32 %v1050, 1.442695
        %v1053 = vpow.pop %v1052
        %v1054 = vmul.f32 %v1051, 1.442695
        %v1055 = vpow.pop %v1054
        %v1056 = vadd.f32 %v1053, 1.0
        %v1057 = vadd.f32 %v1055, 1.0
        %v1058 = vrcp.pop %v1056
        %v1059 = vmul.f32 1.0, %v1058
        %v1060 = vrcp.pop %v1057
        %v1061 = vmul.f32 1.0, %v1060
        %vm1062 = vcmask 130048
        %1063 = vst.msk [vmem:[%s178] sm:$0xff] %vm1062, %v1059
        %1064 = vst.msk [vmem:[%s178 + $0x8] sm:$0xff] %vm1062, %v1061
        %s1065 = sand.u32 %s95, 1
        %s1066 = scalar_lea.sflag [#allocation4], %s1065
        %s1067 = sand.u32 %s95, 1
        %s1068 = smul.addr %s1067, 16
        %s1069 = scalar_lea.vmem [#allocation6], %s1068
        // Predicated region
        $region37: #{tpu_custom_call.1} parent=31 // pred_check
          %p1070 = pneg %p105
        $region38: #{tpu_custom_call.1} parent=31 // pred_check_branch
          %1072 = sbr.rel (%p1070) target = $region40
        $region39: #{tpu_custom_call.1} parent=31 // pred_region
          %s1074 = ssub.s32 256, 256
          %1075 = vsyncadd %s1066, %s1074
          %s1076 = smul.addr %s19, 2
          %s1077 = smul.addr %s1076, 128
          %s1078 = scalar_lea.hbm %s3, %s1077
          %s1079 = sshll.u32 %s1069, 4
          %s1080 = int_to_ptr.vmem [resolvable:$true] %s1079
          %1085 = dma.vmem_to_hbm [thread:$0]  %s1080, 256, %s1078, %s1066, 128, 128, 8
        $region40: #{tpu_custom_call.1} parent=31 // pred_fallthru
          _
      $region32: #{tpu_custom_call.1} parent=5 // pred_fallthru
        _
      %p1086 = scmp.le.s32.totalorder 2, %s14
      // Predicated region
      $region41: #{tpu_custom_call.1} parent=5 // pred_check
        %p1087 = pneg %p1086
      $region42: #{tpu_custom_call.1} parent=5 // pred_check_branch
        %1089 = sbr.rel (%p1087) target = $region44
      $region43: #{tpu_custom_call.1} parent=5 // pred_region
        %s1090 = ssub.s32 %s14, 2
        // Predicated region
        $region45: #{tpu_custom_call.1} parent=43 // pred_check
          %p1091 = pneg %p111
        $region46: #{tpu_custom_call.1} parent=43 // pred_check_branch
          %1093 = sbr.rel (%p1091) target = $region48
        $region47: #{tpu_custom_call.1} parent=43 // pred_region
          %s1094 = sand.u32 %s96, 1
          %s1095 = scalar_lea.sflag [#allocation4], %s1094
          %s1096 = sand.u32 %s96, 1
          %s1097 = smul.addr %s1096, 16
          %s1098 = scalar_lea.vmem [#allocation6], %s1097
          %1099 = dma.done %s1095, 256
        $region48: #{tpu_custom_call.1} parent=43 // pred_fallthru
          _
      $region44: #{tpu_custom_call.1} parent=5 // pred_fallthru
        _
    $region6: #{tpu_custom_call.1} parent=1 // loop_footer
      %s18 = sadd.s32 1, %s14
    $region7: #{tpu_custom_call.1} parent=1 // loop_footer_branch
      %13 = sbr.rel target = $region3
    $region8: #{tpu_custom_call.1} parent=1 // loop_exit
      _
    %1100 = vsyncpa [#allocation4], 1
    %s1101 = scalar_lea.sflag [#allocation4], 1
    %1102 = vsyncpa %s1101, 1
    %1103 = vsyncpa [#allocation5], 1
    %s1104 = scalar_lea.sflag [#allocation5], 1
    %1105 = vsyncpa %s1104, 1

</llo_original>
